<compile_context>
chip_gen: v7x
topology: tpu7x:2x2x1
jax: 0.10.0
libtpu: 0.0.40
codegen_flags: <defaults>
</compile_context>

<pallas_src>
import math
from functools import partial

import jax
import jax.numpy as jnp
from jax import lax
from jax.experimental import pallas as pl
from jax.experimental.pallas import tpu as pltpu


def mha_kernel(*refs, n_heads, d_k, causal, has_mask):
    if has_mask:
        (q_ref, k_ref, v_ref, bias_ref,
         wq_ref, bq_ref, wk_ref, bk_ref, wv_ref, bv_ref,
         wo_ref, bo_ref, o_ref) = refs
    else:
        (q_ref, k_ref, v_ref,
         wq_ref, bq_ref, wk_ref, bk_ref, wv_ref, bv_ref,
         wo_ref, bo_ref, o_ref) = refs
        bias_ref = None

    bb, S, D = q_ref.shape
    R = bb * S
    scale = 1.0 / math.sqrt(d_k)

    # (bb, S, D) -> (R, D): merges leading dims only (last dim untouched -> no relayout).
    q = q_ref[...].reshape(R, D)
    k = k_ref[...].reshape(R, D)
    v = v_ref[...].reshape(R, D)

    # Full-width projections: one (R, D) @ (D, D) bf16 matmul + one fused f32 bias add
    # each (3 MXU weight pushes per step instead of 12).
    # NOTE: at D=32 the contraction fills only 32/256 MXU rows on v6e/v7x (32/128 on
    # v5e); the kernel is DMA/overhead-bound at these dims, so no K-tiling is attempted.
    qp = jnp.dot(q, wq_ref[...], preferred_element_type=jnp.float32) + bq_ref[...]
    kp = jnp.dot(k, wk_ref[...], preferred_element_type=jnp.float32) + bk_ref[...]
    vp = jnp.dot(v, wv_ref[...], preferred_element_type=jnp.float32) + bv_ref[...]

    # 1/sqrt(d_k) folded once into the (R, D) Q projection (covers every head).
    qp = qp * scale

    # bf16 only at the MXU operand boundary; softmax math stays f32.
    qp = qp.astype(jnp.bfloat16).reshape(bb, S, D)
    kp = kp.astype(jnp.bfloat16).reshape(bb, S, D)
    vp = vp.astype(jnp.bfloat16).reshape(bb, S, D)

    # Additive mask bias, built/loaded once per step and hoisted out of the head loop.
    if has_mask:
        neg_bias = bias_ref[...]                                       # (bb, S, S) f32
    elif causal:
        # DMA-free causal mask from iota comparisons.
        row = lax.broadcasted_iota(jnp.int32, (S, S), 0)
        col = lax.broadcasted_iota(jnp.int32, (S, S), 1)
        neg_bias = jnp.broadcast_to(
            jnp.where(col <= row, 0.0, -1e9).astype(jnp.float32)[None], (bb, S, S))
    else:
        neg_bias = None

    acc = jnp.zeros((R, D), jnp.float32)
    # Static unroll over heads (neutral at H=4).
    # TODO(synk): for H >= 8 / realistic S, switch to lax.fori_loop(..., unroll=True)
    # or a head grid axis so per-head live ranges (s/p/ctx) stay bounded.
    for h in range(n_heads):
        hs = slice(h * d_k, (h + 1) * d_k)
        qh, kh, vh = qp[:, :, hs], kp[:, :, hs], vp[:, :, hs]          # (bb, S, d_k)

        # Scores contract the last axes directly (no kh.T materialized via the XLU).
        s = jnp.einsum('bqd,bkd->bqk', qh, kh, preferred_element_type=jnp.float32)
        if neg_bias is not None:
            s = s + neg_bias

        # Numerically stable softmax in f32; approx reciprocal lands on the EUP slot.
        s = s - jnp.max(s, axis=-1, keepdims=True)
        p = jnp.exp(s)
        inv = pl.reciprocal(jnp.sum(p, axis=-1, keepdims=True), approx=True)
        attn = (p * inv).astype(jnp.bfloat16)

        ctx = jnp.einsum('bqk,bkd->bqd', attn, vh,
                         preferred_element_type=jnp.float32)            # (bb, S, d_k)

        # Head-concat fused into the output projection: acc += ctx_h @ Wo[h].
        acc = acc + jnp.dot(ctx.reshape(R, d_k).astype(jnp.bfloat16), wo_ref[h],
                            preferred_element_type=jnp.float32)

    # Single bf16 cast at the store; output presented lane-dense as (bb, 1, S*D)
    # (256 lanes) assembled with a lane-axis concat (no lane<->sublane reshape).
    out3 = (acc + bo_ref[...]).astype(jnp.bfloat16).reshape(bb, S, D)
    o_ref[...] = jnp.concatenate([out3[:, s_, :] for s_ in range(S)], axis=-1)[:, None, :]


def _pick_batch_block(B, S, D, H, has_mask, budget_bytes):
    """Largest divisor-of-B batch block whose estimated VMEM footprint fits the budget,
    while keeping >= 2 grid steps so the 'parallel' axis can split over v7x's two TCs."""
    d_k = D // H
    pad = lambda n: max(n, 128)   # rough lane-padding of narrow (<128) trailing dims
    # Resident (double-buffered) weights/biases.
    weight_bytes = 2 * (3 * D * pad(D) * 2 + H * d_k * pad(D) * 2 + 4 * pad(D) * 4)
    # Per batch element: double-buffered bf16 I/O blocks, live f32 projections +
    # accumulator, and f32 score/prob/bias intermediates.
    per_batch = (2 * 3 * S * pad(D) * 2        # q/k/v input blocks (bf16, x2 buffers)
                 + 2 * pad(S * D) * 2          # lane-dense bf16 output block
                 + 4 * S * pad(D) * 4          # qp/kp/vp/acc (f32)
                 + 3 * S * pad(S) * 4)         # s / p / bias (f32)
    if has_mask:
        per_batch += 2 * S * pad(S) * 4        # DMA'd f32 mask-bias block
    bb = 1
    for cand in range(1, B + 1):
        if B % cand:
            continue
        if B >= 2 and B // cand < 2:
            continue                            # keep >= 2 grid steps for v7x megacore
        if weight_bytes + cand * per_batch <= budget_bytes:
            bb = cand
    return bb


def multi_head_attention(q, k, v, params, mask=None, *, n_heads, batch_block=None,
                         vmem_budget_bytes=24 << 20):
    B, S, D = q.shape
    assert D % n_heads == 0
    H, d_k = n_heads, D // n_heads

    causal = isinstance(mask, str) and mask == "causal"
    has_mask = (mask is not None) and not causal

    if batch_block is None:
        bb = _pick_batch_block(B, S, D, H, has_mask, vmem_budget_bytes)
    else:
        bb = batch_block
    assert B % bb == 0
    grid = (B // bb,)

    wq, bq, wk, bk, wv, bv, wo, bo = params
    # PyTorch nn.Linear stores W as (out, in); the kernel consumes x @ W.T, so ship W.T.
    to_in = lambda w: jnp.asarray(w).T.astype(jnp.bfloat16)               # (D, D)
    to_b = lambda b: jnp.asarray(b).reshape(1, D).astype(jnp.float32)     # (1, D)
    wq_t, wk_t, wv_t = to_in(wq), to_in(wk), to_in(wv)
    bq2, bk2, bv2 = to_b(bq), to_b(bk), to_b(bv)
    # Output projection pre-split per head (head-concat fused into acc += ctx_h @ Wo[h]).
    wo_h = jnp.asarray(wo).T.reshape(H, d_k, D).astype(jnp.bfloat16)      # (H, d_k, D)
    bo2 = to_b(bo)

    # bf16 activations: halves the HBM bytes DMA'd into the kernel.
    qb, kb, vb = (jnp.asarray(x).astype(jnp.bfloat16) for x in (q, k, v))

    act_spec = pl.BlockSpec((bb, S, D), lambda i: (i, 0, 0))
    out_spec = pl.BlockSpec((bb, 1, S * D), lambda i: (i, 0, 0))          # lane-dense

    operands = [qb, kb, vb]
    in_specs = [act_spec, act_spec, act_spec]
    if has_mask:
        m = jnp.asarray(mask)
        if m.ndim == 4:           # mask.unsqueeze(1): shared across heads
            m = m[:, 0]
        # TODO(synk): at realistic S, avoid this O(S^2) stream entirely (KV-tiled
        # flash softmax) or pack it; a (bb, S, S) block pads to (8, 128) tiles in VMEM.
        bias = jnp.where(m != 0, 0.0, -1e9).astype(jnp.float32)           # (B, S, S)
        operands.append(bias)
        in_specs.append(pl.BlockSpec((bb, S, S), lambda i: (i, 0, 0)))

    # Constant-index weight/bias operands (no re-DMA across steps).
    # TODO(synk): at realistic D, single-buffer these (pipeline_mode=pl.Buffered(1)) to
    # halve their resident footprint under v7x's 64 MiB VMEM.
    w_specs = [
        pl.BlockSpec((D, D), lambda i: (0, 0)),          # Wq^T
        pl.BlockSpec((1, D), lambda i: (0, 0)),          # bq
        pl.BlockSpec((D, D), lambda i: (0, 0)),          # Wk^T
        pl.BlockSpec((1, D), lambda i: (0, 0)),          # bk
        pl.BlockSpec((D, D), lambda i: (0, 0)),          # Wv^T
        pl.BlockSpec((1, D), lambda i: (0, 0)),          # bv
        pl.BlockSpec((H, d_k, D), lambda i: (0, 0, 0)),  # Wo per head
        pl.BlockSpec((1, D), lambda i: (0, 0)),          # bo
    ]
    operands += [wq_t, bq2, wk_t, bk2, wv_t, bv2, wo_h, bo2]
    in_specs += w_specs

    kernel = partial(mha_kernel, n_heads=H, d_k=d_k, causal=causal, has_mask=has_mask)

    out = pl.pallas_call(
        kernel,
        out_shape=jax.ShapeDtypeStruct((B, 1, S * D), jnp.bfloat16),
        grid_spec=pltpu.PrefetchScalarGridSpec(
            num_scalar_prefetch=0,
            grid=grid,
            in_specs=in_specs,
            out_specs=out_spec),
        compiler_params=pltpu.CompilerParams(
            dimension_semantics=("parallel",),
            vmem_limit_bytes=32 * 1024 * 1024),
    )(*operands)
    return out.reshape(B, S, D)


def reference_mha(q, k, v, params, mask, n_heads):
    """Pure-JAX reference mirroring the intended PyTorch forward.

    Inputs/weights are rounded through bf16 (like the kernel's matmul operands) so
    the comparison only sees the kernel's small intermediate-rounding differences.
    """
    wq, bq, wk, bk, wv, bv, wo, bo = params
    B, S, D = q.shape
    d_k = D // n_heads

    rnd = lambda x: jnp.asarray(x).astype(jnp.bfloat16).astype(jnp.float32)
    q, k, v = rnd(q), rnd(k), rnd(v)
    wq, wk, wv, wo = rnd(wq), rnd(wk), rnd(wv), rnd(wo)

    def proj(x, w, b):
        return x @ w.T + b

    qp = proj(q, wq, bq).reshape(B, S, n_heads, d_k).transpose(0, 2, 1, 3)
    kp = proj(k, wk, bk).reshape(B, S, n_heads, d_k).transpose(0, 2, 1, 3)
    vp = proj(v, wv, bv).reshape(B, S, n_heads, d_k).transpose(0, 2, 1, 3)

    scores = jnp.einsum('bhqd,bhkd->bhqk', qp, kp) / math.sqrt(d_k)
    scores = jnp.where(mask[:, None, :, :] == 0, -1e9, scores)
    attn = jax.nn.softmax(scores, axis=-1)
    ctx = jnp.einsum('bhqk,bhkd->bhqd', attn, vp).transpose(0, 2, 1, 3).reshape(B, S, D)
    return ctx @ wo.T + bo


if __name__ == "__main__":
    B, S, D, H = 2, 8, 32, 4  # batch, seq, d_model, n_heads  (d_k = 8)

    key = jax.random.PRNGKey(0)
    keys = jax.random.split(key, 11)

    q = jax.random.normal(keys[0], (B, S, D), dtype=jnp.float32)
    k = jax.random.normal(keys[1], (B, S, D), dtype=jnp.float32)
    v = jax.random.normal(keys[2], (B, S, D), dtype=jnp.float32)

    # Deterministic synthetic parameters for the 4 nn.Linear(d_model, d_model) clones.
    bound = 1.0 / math.sqrt(D)
    def lin(kw, kb):
        w = jax.random.uniform(kw, (D, D), jnp.float32, -bound, bound)  # (out, in)
        b = jax.random.uniform(kb, (D,), jnp.float32, -bound, bound)
        return w, b

    wq, bq = lin(keys[3], keys[4])
    wk, bk = lin(keys[5], keys[6])
    wv, bv = lin(keys[7], keys[8])
    wo, bo = lin(keys[9], keys[10])
    params = (wq, bq, wk, bk, wv, bv, wo, bo)

    # Causal masking exercised via the DMA-free in-kernel path.
    out = multi_head_attention(q, k, v, params, mask="causal", n_heads=H)
    out = jax.block_until_ready(out)

    # Reference applies the equivalent explicit tril mask (masked_fill semantics).
    mask = jnp.tril(jnp.ones((S, S), dtype=jnp.float32))[None].repeat(B, axis=0)
    ref = reference_mha(q, k, v, params, mask, H)

    assert out.shape == (B, S, D)
    # bf16 MXU operands + bf16 output + approx reciprocal -> bf16-appropriate tolerance
    # (revalidated for the bf16 output dtype).
    assert jnp.allclose(out.astype(jnp.float32), ref, atol=3e-2, rtol=3e-2), \
        "Pallas output mismatch vs reference"

    print("KERNEL_OK")
</pallas_src>

<mosaic_0001>
module attributes {stable_mosaic.version = 11 : i64} {
  func.func @mha_kernel(%arg0: i32, %arg1: memref<1x8x32xbf16, #tpu.memory_space<vmem>>, %arg2: memref<1x8x32xbf16, #tpu.memory_space<vmem>>, %arg3: memref<1x8x32xbf16, #tpu.memory_space<vmem>>, %arg4: memref<32x32xbf16, #tpu.memory_space<vmem>>, %arg5: memref<1x32xf32, #tpu.memory_space<vmem>>, %arg6: memref<32x32xbf16, #tpu.memory_space<vmem>>, %arg7: memref<1x32xf32, #tpu.memory_space<vmem>>, %arg8: memref<32x32xbf16, #tpu.memory_space<vmem>>, %arg9: memref<1x32xf32, #tpu.memory_space<vmem>>, %arg10: memref<4x8x32xbf16, #tpu.memory_space<vmem>>, %arg11: memref<1x32xf32, #tpu.memory_space<vmem>>, %arg12: memref<1x1x256xbf16, #tpu.memory_space<vmem>>) attributes {dimension_semantics = [#tpu.dimension_semantics<parallel>], iteration_bounds = array<i64: 2>, scalar_prefetch = 0 : i64, scratch_operands = 0 : i64, tpu.core_type = #tpu.core_type<tc>, window_params = [{transform_indices = @transform_0, window_bounds = array<i64: 1, 8, 32>}, {transform_indices = @transform_1, window_bounds = array<i64: 1, 8, 32>}, {transform_indices = @transform_2, window_bounds = array<i64: 1, 8, 32>}, {pipeline_mode = #tpu.pipeline_mode<synchronous>, transform_indices = @transform_3, window_bounds = array<i64: 32, 32>}, {pipeline_mode = #tpu.pipeline_mode<synchronous>, transform_indices = @transform_4, window_bounds = array<i64: 1, 32>}, {pipeline_mode = #tpu.pipeline_mode<synchronous>, transform_indices = @transform_5, window_bounds = array<i64: 32, 32>}, {pipeline_mode = #tpu.pipeline_mode<synchronous>, transform_indices = @transform_6, window_bounds = array<i64: 1, 32>}, {pipeline_mode = #tpu.pipeline_mode<synchronous>, transform_indices = @transform_7, window_bounds = array<i64: 32, 32>}, {pipeline_mode = #tpu.pipeline_mode<synchronous>, transform_indices = @transform_8, window_bounds = array<i64: 1, 32>}, {pipeline_mode = #tpu.pipeline_mode<synchronous>, transform_indices = @transform_9, window_bounds = array<i64: 4, 8, 32>}, {pipeline_mode = #tpu.pipeline_mode<synchronous>, transform_indices = @transform_10, window_bounds = array<i64: 1, 32>}, {transform_indices = @transform_11, window_bounds = array<i64: 1, 1, 256>}]} {
    %c0 = arith.constant 0 : index
    %c0_0 = arith.constant 0 : index
    %c0_1 = arith.constant 0 : index
    %0 = vector.load %arg1[%c0, %c0_0, %c0_1] : memref<1x8x32xbf16, #tpu.memory_space<vmem>>, vector<1x8x32xbf16>
    %1 = vector.shape_cast %0 : vector<1x8x32xbf16> to vector<8x32xbf16>
    %c0_2 = arith.constant 0 : index
    %c0_3 = arith.constant 0 : index
    %c0_4 = arith.constant 0 : index
    %2 = vector.load %arg2[%c0_2, %c0_3, %c0_4] : memref<1x8x32xbf16, #tpu.memory_space<vmem>>, vector<1x8x32xbf16>
    %3 = vector.shape_cast %2 : vector<1x8x32xbf16> to vector<8x32xbf16>
    %c0_5 = arith.constant 0 : index
    %c0_6 = arith.constant 0 : index
    %c0_7 = arith.constant 0 : index
    %4 = vector.load %arg3[%c0_5, %c0_6, %c0_7] : memref<1x8x32xbf16, #tpu.memory_space<vmem>>, vector<1x8x32xbf16>
    %5 = vector.shape_cast %4 : vector<1x8x32xbf16> to vector<8x32xbf16>
    %c0_8 = arith.constant 0 : index
    %c0_9 = arith.constant 0 : index
    %6 = vector.load %arg4[%c0_8, %c0_9] : memref<32x32xbf16, #tpu.memory_space<vmem>>, vector<32x32xbf16>
    %cst = arith.constant dense<0.000000e+00> : vector<8x32xf32>
    %7 = tpu.matmul %1, %6, %cst {dimension_numbers = #tpu.dot_dimension_numbers<[1], [0], [0], [1], [0, 0, 1, 1], [], []>} : vector<8x32xbf16>, vector<32x32xbf16>, vector<8x32xf32> -> vector<8x32xf32>
    %c0_10 = arith.constant 0 : index
    %c0_11 = arith.constant 0 : index
    %8 = vector.load %arg5[%c0_10, %c0_11] : memref<1x32xf32, #tpu.memory_space<vmem>>, vector<1x32xf32>
    %9 = vector.broadcast %8 : vector<1x32xf32> to vector<8x32xf32>
    %10 = arith.addf %7, %9 : vector<8x32xf32>
    %c0_12 = arith.constant 0 : index
    %c0_13 = arith.constant 0 : index
    %11 = vector.load %arg6[%c0_12, %c0_13] : memref<32x32xbf16, #tpu.memory_space<vmem>>, vector<32x32xbf16>
    %cst_14 = arith.constant dense<0.000000e+00> : vector<8x32xf32>
    %12 = tpu.matmul %3, %11, %cst_14 {dimension_numbers = #tpu.dot_dimension_numbers<[1], [0], [0], [1], [0, 0, 1, 1], [], []>} : vector<8x32xbf16>, vector<32x32xbf16>, vector<8x32xf32> -> vector<8x32xf32>
    %c0_15 = arith.constant 0 : index
    %c0_16 = arith.constant 0 : index
    %13 = vector.load %arg7[%c0_15, %c0_16] : memref<1x32xf32, #tpu.memory_space<vmem>>, vector<1x32xf32>
    %14 = vector.broadcast %13 : vector<1x32xf32> to vector<8x32xf32>
    %15 = arith.addf %12, %14 : vector<8x32xf32>
    %c0_17 = arith.constant 0 : index
    %c0_18 = arith.constant 0 : index
    %16 = vector.load %arg8[%c0_17, %c0_18] : memref<32x32xbf16, #tpu.memory_space<vmem>>, vector<32x32xbf16>
    %cst_19 = arith.constant dense<0.000000e+00> : vector<8x32xf32>
    %17 = tpu.matmul %5, %16, %cst_19 {dimension_numbers = #tpu.dot_dimension_numbers<[1], [0], [0], [1], [0, 0, 1, 1], [], []>} : vector<8x32xbf16>, vector<32x32xbf16>, vector<8x32xf32> -> vector<8x32xf32>
    %c0_20 = arith.constant 0 : index
    %c0_21 = arith.constant 0 : index
    %18 = vector.load %arg9[%c0_20, %c0_21] : memref<1x32xf32, #tpu.memory_space<vmem>>, vector<1x32xf32>
    %19 = vector.broadcast %18 : vector<1x32xf32> to vector<8x32xf32>
    %20 = arith.addf %17, %19 : vector<8x32xf32>
    %cst_22 = arith.constant 0.353553385 : f32
    %21 = vector.broadcast %cst_22 : f32 to vector<8x32xf32>
    %22 = arith.mulf %10, %21 : vector<8x32xf32>
    %23 = arith.truncf %22 : vector<8x32xf32> to vector<8x32xbf16>
    %24 = vector.shape_cast %23 : vector<8x32xbf16> to vector<1x8x32xbf16>
    %25 = arith.truncf %15 : vector<8x32xf32> to vector<8x32xbf16>
    %26 = vector.shape_cast %25 : vector<8x32xbf16> to vector<1x8x32xbf16>
    %27 = arith.truncf %20 : vector<8x32xf32> to vector<8x32xbf16>
    %28 = vector.shape_cast %27 : vector<8x32xbf16> to vector<1x8x32xbf16>
    %29 = tpu.iota {dimensions = array<i32: 0>} : vector<8x8xi32>
    %30 = tpu.iota {dimensions = array<i32: 1>} : vector<8x8xi32>
    %31 = arith.cmpi sle, %30, %29 : vector<8x8xi32>
    %cst_23 = arith.constant 0.000000e+00 : f32
    %cst_24 = arith.constant -1.000000e+09 : f32
    %32 = vector.broadcast %cst_23 : f32 to vector<8x8xf32>
    %33 = vector.broadcast %cst_24 : f32 to vector<8x8xf32>
    %34 = arith.select %31, %32, %33 : vector<8x8xi1>, vector<8x8xf32>
    %35 = vector.shape_cast %34 : vector<8x8xf32> to vector<1x8x8xf32>
    %cst_25 = arith.constant 0.000000e+00 : f32
    %36 = vector.broadcast %cst_25 : f32 to vector<8x32xf32>
    %37 = vector.extract_strided_slice %24 {offsets = [0, 0, 0], sizes = [1, 8, 8], strides = [1, 1, 1]} : vector<1x8x32xbf16> to vector<1x8x8xbf16>
    %38 = vector.extract_strided_slice %26 {offsets = [0, 0, 0], sizes = [1, 8, 8], strides = [1, 1, 1]} : vector<1x8x32xbf16> to vector<1x8x8xbf16>
    %39 = vector.extract_strided_slice %28 {offsets = [0, 0, 0], sizes = [1, 8, 8], strides = [1, 1, 1]} : vector<1x8x32xbf16> to vector<1x8x8xbf16>
    "tpu.trace_start"() <{level = 10 : i32, message = "bqd,bkd->bqk"}> : () -> ()
    %cst_26 = arith.constant dense<0.000000e+00> : vector<1x8x8xf32>
    %40 = tpu.matmul %37, %38, %cst_26 {dimension_numbers = #tpu.dot_dimension_numbers<[2], [2], [1], [1], [0, 0, 0, 1, 1, 1], [0], [0]>} : vector<1x8x8xbf16>, vector<1x8x8xbf16>, vector<1x8x8xf32> -> vector<1x8x8xf32>
    "tpu.trace_stop"() : () -> ()
    %41 = arith.addf %40, %35 : vector<1x8x8xf32>
    %cst_27 = arith.constant dense<0xFF800000> : vector<1x8xf32>
    %42 = vector.multi_reduction <maximumf>, %41, %cst_27 [2] : vector<1x8x8xf32> to vector<1x8xf32>
    %43 = vector.shape_cast %42 : vector<1x8xf32> to vector<1x8x1xf32>
    %44 = vector.broadcast %43 : vector<1x8x1xf32> to vector<1x8x8xf32>
    %45 = arith.subf %41, %44 : vector<1x8x8xf32>
    %46 = math.exp %45 : vector<1x8x8xf32>
    %cst_28 = arith.constant dense<0.000000e+00> : vector<1x8xf32>
    %47 = vector.multi_reduction <add>, %46, %cst_28 [2] : vector<1x8x8xf32> to vector<1x8xf32>
    %48 = vector.shape_cast %47 : vector<1x8xf32> to vector<1x8x1xf32>
    %49 = tpu.reciprocal %48 {approx = true} : vector<1x8x1xf32> -> vector<1x8x1xf32>
    %50 = vector.broadcast %49 : vector<1x8x1xf32> to vector<1x8x8xf32>
    %51 = arith.mulf %46, %50 : vector<1x8x8xf32>
    %52 = arith.truncf %51 : vector<1x8x8xf32> to vector<1x8x8xbf16>
    "tpu.trace_start"() <{level = 10 : i32, message = "bqk,bkd->bqd"}> : () -> ()
    %cst_29 = arith.constant dense<0.000000e+00> : vector<1x8x8xf32>
    %53 = tpu.matmul %52, %39, %cst_29 {dimension_numbers = #tpu.dot_dimension_numbers<[2], [1], [1], [2], [0, 0, 0, 1, 1, 2], [0], [0]>} : vector<1x8x8xbf16>, vector<1x8x8xbf16>, vector<1x8x8xf32> -> vector<1x8x8xf32>
    "tpu.trace_stop"() : () -> ()
    %54 = vector.shape_cast %53 : vector<1x8x8xf32> to vector<8x8xf32>
    %55 = arith.truncf %54 : vector<8x8xf32> to vector<8x8xbf16>
    %c0_30 = arith.constant 0 : index
    %c0_31 = arith.constant 0 : index
    %c0_32 = arith.constant 0 : index
    %56 = vector.load %arg10[%c0_30, %c0_31, %c0_32] : memref<4x8x32xbf16, #tpu.memory_space<vmem>>, vector<1x8x32xbf16>
    %57 = vector.shape_cast %56 : vector<1x8x32xbf16> to vector<8x32xbf16>
    %cst_33 = arith.constant dense<0.000000e+00> : vector<8x32xf32>
    %58 = tpu.matmul %55, %57, %cst_33 {dimension_numbers = #tpu.dot_dimension_numbers<[1], [0], [0], [1], [0, 0, 1, 1], [], []>} : vector<8x8xbf16>, vector<8x32xbf16>, vector<8x32xf32> -> vector<8x32xf32>
    %59 = arith.addf %36, %58 : vector<8x32xf32>
    %60 = vector.extract_strided_slice %24 {offsets = [0, 0, 8], sizes = [1, 8, 8], strides = [1, 1, 1]} : vector<1x8x32xbf16> to vector<1x8x8xbf16>
    %61 = vector.extract_strided_slice %26 {offsets = [0, 0, 8], sizes = [1, 8, 8], strides = [1, 1, 1]} : vector<1x8x32xbf16> to vector<1x8x8xbf16>
    %62 = vector.extract_strided_slice %28 {offsets = [0, 0, 8], sizes = [1, 8, 8], strides = [1, 1, 1]} : vector<1x8x32xbf16> to vector<1x8x8xbf16>
    "tpu.trace_start"() <{level = 10 : i32, message = "bqd,bkd->bqk"}> : () -> ()
    %cst_34 = arith.constant dense<0.000000e+00> : vector<1x8x8xf32>
    %63 = tpu.matmul %60, %61, %cst_34 {dimension_numbers = #tpu.dot_dimension_numbers<[2], [2], [1], [1], [0, 0, 0, 1, 1, 1], [0], [0]>} : vector<1x8x8xbf16>, vector<1x8x8xbf16>, vector<1x8x8xf32> -> vector<1x8x8xf32>
    "tpu.trace_stop"() : () -> ()
    %64 = arith.addf %63, %35 : vector<1x8x8xf32>
    %cst_35 = arith.constant dense<0xFF800000> : vector<1x8xf32>
    %65 = vector.multi_reduction <maximumf>, %64, %cst_35 [2] : vector<1x8x8xf32> to vector<1x8xf32>
    %66 = vector.shape_cast %65 : vector<1x8xf32> to vector<1x8x1xf32>
    %67 = vector.broadcast %66 : vector<1x8x1xf32> to vector<1x8x8xf32>
    %68 = arith.subf %64, %67 : vector<1x8x8xf32>
    %69 = math.exp %68 : vector<1x8x8xf32>
    %cst_36 = arith.constant dense<0.000000e+00> : vector<1x8xf32>
    %70 = vector.multi_reduction <add>, %69, %cst_36 [2] : vector<1x8x8xf32> to vector<1x8xf32>
    %71 = vector.shape_cast %70 : vector<1x8xf32> to vector<1x8x1xf32>
    %72 = tpu.reciprocal %71 {approx = true} : vector<1x8x1xf32> -> vector<1x8x1xf32>
    %73 = vector.broadcast %72 : vector<1x8x1xf32> to vector<1x8x8xf32>
    %74 = arith.mulf %69, %73 : vector<1x8x8xf32>
    %75 = arith.truncf %74 : vector<1x8x8xf32> to vector<1x8x8xbf16>
    "tpu.trace_start"() <{level = 10 : i32, message = "bqk,bkd->bqd"}> : () -> ()
    %cst_37 = arith.constant dense<0.000000e+00> : vector<1x8x8xf32>
    %76 = tpu.matmul %75, %62, %cst_37 {dimension_numbers = #tpu.dot_dimension_numbers<[2], [1], [1], [2], [0, 0, 0, 1, 1, 2], [0], [0]>} : vector<1x8x8xbf16>, vector<1x8x8xbf16>, vector<1x8x8xf32> -> vector<1x8x8xf32>
    "tpu.trace_stop"() : () -> ()
    %77 = vector.shape_cast %76 : vector<1x8x8xf32> to vector<8x8xf32>
    %78 = arith.truncf %77 : vector<8x8xf32> to vector<8x8xbf16>
    %c1 = arith.constant 1 : index
    %c0_38 = arith.constant 0 : index
    %c0_39 = arith.constant 0 : index
    %79 = vector.load %arg10[%c1, %c0_38, %c0_39] : memref<4x8x32xbf16, #tpu.memory_space<vmem>>, vector<1x8x32xbf16>
    %80 = vector.shape_cast %79 : vector<1x8x32xbf16> to vector<8x32xbf16>
    %cst_40 = arith.constant dense<0.000000e+00> : vector<8x32xf32>
    %81 = tpu.matmul %78, %80, %cst_40 {dimension_numbers = #tpu.dot_dimension_numbers<[1], [0], [0], [1], [0, 0, 1, 1], [], []>} : vector<8x8xbf16>, vector<8x32xbf16>, vector<8x32xf32> -> vector<8x32xf32>
    %82 = arith.addf %59, %81 : vector<8x32xf32>
    %83 = vector.extract_strided_slice %24 {offsets = [0, 0, 16], sizes = [1, 8, 8], strides = [1, 1, 1]} : vector<1x8x32xbf16> to vector<1x8x8xbf16>
    %84 = vector.extract_strided_slice %26 {offsets = [0, 0, 16], sizes = [1, 8, 8], strides = [1, 1, 1]} : vector<1x8x32xbf16> to vector<1x8x8xbf16>
    %85 = vector.extract_strided_slice %28 {offsets = [0, 0, 16], sizes = [1, 8, 8], strides = [1, 1, 1]} : vector<1x8x32xbf16> to vector<1x8x8xbf16>
    "tpu.trace_start"() <{level = 10 : i32, message = "bqd,bkd->bqk"}> : () -> ()
    %cst_41 = arith.constant dense<0.000000e+00> : vector<1x8x8xf32>
    %86 = tpu.matmul %83, %84, %cst_41 {dimension_numbers = #tpu.dot_dimension_numbers<[2], [2], [1], [1], [0, 0, 0, 1, 1, 1], [0], [0]>} : vector<1x8x8xbf16>, vector<1x8x8xbf16>, vector<1x8x8xf32> -> vector<1x8x8xf32>
    "tpu.trace_stop"() : () -> ()
    %87 = arith.addf %86, %35 : vector<1x8x8xf32>
    %cst_42 = arith.constant dense<0xFF800000> : vector<1x8xf32>
    %88 = vector.multi_reduction <maximumf>, %87, %cst_42 [2] : vector<1x8x8xf32> to vector<1x8xf32>
    %89 = vector.shape_cast %88 : vector<1x8xf32> to vector<1x8x1xf32>
    %90 = vector.broadcast %89 : vector<1x8x1xf32> to vector<1x8x8xf32>
    %91 = arith.subf %87, %90 : vector<1x8x8xf32>
    %92 = math.exp %91 : vector<1x8x8xf32>
    %cst_43 = arith.constant dense<0.000000e+00> : vector<1x8xf32>
    %93 = vector.multi_reduction <add>, %92, %cst_43 [2] : vector<1x8x8xf32> to vector<1x8xf32>
    %94 = vector.shape_cast %93 : vector<1x8xf32> to vector<1x8x1xf32>
    %95 = tpu.reciprocal %94 {approx = true} : vector<1x8x1xf32> -> vector<1x8x1xf32>
    %96 = vector.broadcast %95 : vector<1x8x1xf32> to vector<1x8x8xf32>
    %97 = arith.mulf %92, %96 : vector<1x8x8xf32>
    %98 = arith.truncf %97 : vector<1x8x8xf32> to vector<1x8x8xbf16>
    "tpu.trace_start"() <{level = 10 : i32, message = "bqk,bkd->bqd"}> : () -> ()
    %cst_44 = arith.constant dense<0.000000e+00> : vector<1x8x8xf32>
    %99 = tpu.matmul %98, %85, %cst_44 {dimension_numbers = #tpu.dot_dimension_numbers<[2], [1], [1], [2], [0, 0, 0, 1, 1, 2], [0], [0]>} : vector<1x8x8xbf16>, vector<1x8x8xbf16>, vector<1x8x8xf32> -> vector<1x8x8xf32>
    "tpu.trace_stop"() : () -> ()
    %100 = vector.shape_cast %99 : vector<1x8x8xf32> to vector<8x8xf32>
    %101 = arith.truncf %100 : vector<8x8xf32> to vector<8x8xbf16>
    %c2 = arith.constant 2 : index
    %c0_45 = arith.constant 0 : index
    %c0_46 = arith.constant 0 : index
    %102 = vector.load %arg10[%c2, %c0_45, %c0_46] : memref<4x8x32xbf16, #tpu.memory_space<vmem>>, vector<1x8x32xbf16>
    %103 = vector.shape_cast %102 : vector<1x8x32xbf16> to vector<8x32xbf16>
    %cst_47 = arith.constant dense<0.000000e+00> : vector<8x32xf32>
    %104 = tpu.matmul %101, %103, %cst_47 {dimension_numbers = #tpu.dot_dimension_numbers<[1], [0], [0], [1], [0, 0, 1, 1], [], []>} : vector<8x8xbf16>, vector<8x32xbf16>, vector<8x32xf32> -> vector<8x32xf32>
    %105 = arith.addf %82, %104 : vector<8x32xf32>
    %106 = vector.extract_strided_slice %24 {offsets = [0, 0, 24], sizes = [1, 8, 8], strides = [1, 1, 1]} : vector<1x8x32xbf16> to vector<1x8x8xbf16>
    %107 = vector.extract_strided_slice %26 {offsets = [0, 0, 24], sizes = [1, 8, 8], strides = [1, 1, 1]} : vector<1x8x32xbf16> to vector<1x8x8xbf16>
    %108 = vector.extract_strided_slice %28 {offsets = [0, 0, 24], sizes = [1, 8, 8], strides = [1, 1, 1]} : vector<1x8x32xbf16> to vector<1x8x8xbf16>
    "tpu.trace_start"() <{level = 10 : i32, message = "bqd,bkd->bqk"}> : () -> ()
    %cst_48 = arith.constant dense<0.000000e+00> : vector<1x8x8xf32>
    %109 = tpu.matmul %106, %107, %cst_48 {dimension_numbers = #tpu.dot_dimension_numbers<[2], [2], [1], [1], [0, 0, 0, 1, 1, 1], [0], [0]>} : vector<1x8x8xbf16>, vector<1x8x8xbf16>, vector<1x8x8xf32> -> vector<1x8x8xf32>
    "tpu.trace_stop"() : () -> ()
    %110 = arith.addf %109, %35 : vector<1x8x8xf32>
    %cst_49 = arith.constant dense<0xFF800000> : vector<1x8xf32>
    %111 = vector.multi_reduction <maximumf>, %110, %cst_49 [2] : vector<1x8x8xf32> to vector<1x8xf32>
    %112 = vector.shape_cast %111 : vector<1x8xf32> to vector<1x8x1xf32>
    %113 = vector.broadcast %112 : vector<1x8x1xf32> to vector<1x8x8xf32>
    %114 = arith.subf %110, %113 : vector<1x8x8xf32>
    %115 = math.exp %114 : vector<1x8x8xf32>
    %cst_50 = arith.constant dense<0.000000e+00> : vector<1x8xf32>
    %116 = vector.multi_reduction <add>, %115, %cst_50 [2] : vector<1x8x8xf32> to vector<1x8xf32>
    %117 = vector.shape_cast %116 : vector<1x8xf32> to vector<1x8x1xf32>
    %118 = tpu.reciprocal %117 {approx = true} : vector<1x8x1xf32> -> vector<1x8x1xf32>
    %119 = vector.broadcast %118 : vector<1x8x1xf32> to vector<1x8x8xf32>
    %120 = arith.mulf %115, %119 : vector<1x8x8xf32>
    %121 = arith.truncf %120 : vector<1x8x8xf32> to vector<1x8x8xbf16>
    "tpu.trace_start"() <{level = 10 : i32, message = "bqk,bkd->bqd"}> : () -> ()
    %cst_51 = arith.constant dense<0.000000e+00> : vector<1x8x8xf32>
    %122 = tpu.matmul %121, %108, %cst_51 {dimension_numbers = #tpu.dot_dimension_numbers<[2], [1], [1], [2], [0, 0, 0, 1, 1, 2], [0], [0]>} : vector<1x8x8xbf16>, vector<1x8x8xbf16>, vector<1x8x8xf32> -> vector<1x8x8xf32>
    "tpu.trace_stop"() : () -> ()
    %123 = vector.shape_cast %122 : vector<1x8x8xf32> to vector<8x8xf32>
    %124 = arith.truncf %123 : vector<8x8xf32> to vector<8x8xbf16>
    %c3 = arith.constant 3 : index
    %c0_52 = arith.constant 0 : index
    %c0_53 = arith.constant 0 : index
    %125 = vector.load %arg10[%c3, %c0_52, %c0_53] : memref<4x8x32xbf16, #tpu.memory_space<vmem>>, vector<1x8x32xbf16>
    %126 = vector.shape_cast %125 : vector<1x8x32xbf16> to vector<8x32xbf16>
    %cst_54 = arith.constant dense<0.000000e+00> : vector<8x32xf32>
    %127 = tpu.matmul %124, %126, %cst_54 {dimension_numbers = #tpu.dot_dimension_numbers<[1], [0], [0], [1], [0, 0, 1, 1], [], []>} : vector<8x8xbf16>, vector<8x32xbf16>, vector<8x32xf32> -> vector<8x32xf32>
    %128 = arith.addf %105, %127 : vector<8x32xf32>
    %c0_55 = arith.constant 0 : index
    %c0_56 = arith.constant 0 : index
    %129 = vector.load %arg11[%c0_55, %c0_56] : memref<1x32xf32, #tpu.memory_space<vmem>>, vector<1x32xf32>
    %130 = vector.broadcast %129 : vector<1x32xf32> to vector<8x32xf32>
    %131 = arith.addf %128, %130 : vector<8x32xf32>
    %132 = arith.truncf %131 : vector<8x32xf32> to vector<8x32xbf16>
    %133 = vector.shape_cast %132 : vector<8x32xbf16> to vector<1x8x32xbf16>
    %134 = vector.extract_strided_slice %133 {offsets = [0, 0, 0], sizes = [1, 1, 32], strides = [1, 1, 1]} : vector<1x8x32xbf16> to vector<1x1x32xbf16>
    %135 = vector.shape_cast %134 : vector<1x1x32xbf16> to vector<1x32xbf16>
    %136 = vector.extract_strided_slice %133 {offsets = [0, 1, 0], sizes = [1, 1, 32], strides = [1, 1, 1]} : vector<1x8x32xbf16> to vector<1x1x32xbf16>
    %137 = vector.shape_cast %136 : vector<1x1x32xbf16> to vector<1x32xbf16>
    %138 = vector.extract_strided_slice %133 {offsets = [0, 2, 0], sizes = [1, 1, 32], strides = [1, 1, 1]} : vector<1x8x32xbf16> to vector<1x1x32xbf16>
    %139 = vector.shape_cast %138 : vector<1x1x32xbf16> to vector<1x32xbf16>
    %140 = vector.extract_strided_slice %133 {offsets = [0, 3, 0], sizes = [1, 1, 32], strides = [1, 1, 1]} : vector<1x8x32xbf16> to vector<1x1x32xbf16>
    %141 = vector.shape_cast %140 : vector<1x1x32xbf16> to vector<1x32xbf16>
    %142 = vector.extract_strided_slice %133 {offsets = [0, 4, 0], sizes = [1, 1, 32], strides = [1, 1, 1]} : vector<1x8x32xbf16> to vector<1x1x32xbf16>
    %143 = vector.shape_cast %142 : vector<1x1x32xbf16> to vector<1x32xbf16>
    %144 = vector.extract_strided_slice %133 {offsets = [0, 5, 0], sizes = [1, 1, 32], strides = [1, 1, 1]} : vector<1x8x32xbf16> to vector<1x1x32xbf16>
    %145 = vector.shape_cast %144 : vector<1x1x32xbf16> to vector<1x32xbf16>
    %146 = vector.extract_strided_slice %133 {offsets = [0, 6, 0], sizes = [1, 1, 32], strides = [1, 1, 1]} : vector<1x8x32xbf16> to vector<1x1x32xbf16>
    %147 = vector.shape_cast %146 : vector<1x1x32xbf16> to vector<1x32xbf16>
    %148 = vector.extract_strided_slice %133 {offsets = [0, 7, 0], sizes = [1, 1, 32], strides = [1, 1, 1]} : vector<1x8x32xbf16> to vector<1x1x32xbf16>
    %149 = vector.shape_cast %148 : vector<1x1x32xbf16> to vector<1x32xbf16>
    %150 = tpu.concatenate %135, %137, %139, %141, %143, %145, %147, %149 in 1 : vector<1x32xbf16>, vector<1x32xbf16>, vector<1x32xbf16>, vector<1x32xbf16>, vector<1x32xbf16>, vector<1x32xbf16>, vector<1x32xbf16>, vector<1x32xbf16> -> vector<1x256xbf16>
    %151 = vector.shape_cast %150 : vector<1x256xbf16> to vector<1x1x256xbf16>
    %c0_57 = arith.constant 0 : index
    %c0_58 = arith.constant 0 : index
    %c0_59 = arith.constant 0 : index
    %152 = vector.load %arg12[%c0_57, %c0_58, %c0_59] : memref<1x1x256xbf16, #tpu.memory_space<vmem>>, vector<1x1x256xbf16>
    tpu.vector_store %arg12[%c0_57, %c0_58, %c0_59], %151 {strides = array<i32>} : memref<1x1x256xbf16, #tpu.memory_space<vmem>>, vector<1x1x256xbf16>,
    return
  }
  func.func @transform_0(%arg0: i32) -> (i32, i32, i32) {
    %c0_i32 = arith.constant 0 : i32
    %c0_i32_0 = arith.constant 0 : i32
    %c0_i32_1 = arith.constant 0 : i32
    return %arg0, %c0_i32, %c0_i32_0 : i32, i32, i32
  }
  func.func @transform_1(%arg0: i32) -> (i32, i32, i32) {
    %c0_i32 = arith.constant 0 : i32
    %c0_i32_0 = arith.constant 0 : i32
    %c0_i32_1 = arith.constant 0 : i32
    return %arg0, %c0_i32, %c0_i32_0 : i32, i32, i32
  }
  func.func @transform_2(%arg0: i32) -> (i32, i32, i32) {
    %c0_i32 = arith.constant 0 : i32
    %c0_i32_0 = arith.constant 0 : i32
    %c0_i32_1 = arith.constant 0 : i32
    return %arg0, %c0_i32, %c0_i32_0 : i32, i32, i32
  }
  func.func @transform_3(%arg0: i32) -> (i32, i32) {
    %c0_i32 = arith.constant 0 : i32
    %c0_i32_0 = arith.constant 0 : i32
    %c0_i32_1 = arith.constant 0 : i32
    return %c0_i32, %c0_i32_0 : i32, i32
  }
  func.func @transform_4(%arg0: i32) -> (i32, i32) {
    %c0_i32 = arith.constant 0 : i32
    %c0_i32_0 = arith.constant 0 : i32
    %c0_i32_1 = arith.constant 0 : i32
    return %c0_i32, %c0_i32_0 : i32, i32
  }
  func.func @transform_5(%arg0: i32) -> (i32, i32) {
    %c0_i32 = arith.constant 0 : i32
    %c0_i32_0 = arith.constant 0 : i32
    %c0_i32_1 = arith.constant 0 : i32
    return %c0_i32, %c0_i32_0 : i32, i32
  }
  func.func @transform_6(%arg0: i32) -> (i32, i32) {
    %c0_i32 = arith.constant 0 : i32
    %c0_i32_0 = arith.constant 0 : i32
    %c0_i32_1 = arith.constant 0 : i32
    return %c0_i32, %c0_i32_0 : i32, i32
  }
  func.func @transform_7(%arg0: i32) -> (i32, i32) {
    %c0_i32 = arith.constant 0 : i32
    %c0_i32_0 = arith.constant 0 : i32
    %c0_i32_1 = arith.constant 0 : i32
    return %c0_i32, %c0_i32_0 : i32, i32
  }
  func.func @transform_8(%arg0: i32) -> (i32, i32) {
    %c0_i32 = arith.constant 0 : i32
    %c0_i32_0 = arith.constant 0 : i32
    %c0_i32_1 = arith.constant 0 : i32
    return %c0_i32, %c0_i32_0 : i32, i32
  }
  func.func @transform_9(%arg0: i32) -> (i32, i32, i32) {
    %c0_i32 = arith.constant 0 : i32
    %c0_i32_0 = arith.constant 0 : i32
    %c0_i32_1 = arith.constant 0 : i32
    %c0_i32_2 = arith.constant 0 : i32
    return %c0_i32, %c0_i32_0, %c0_i32_1 : i32, i32, i32
  }
  func.func @transform_10(%arg0: i32) -> (i32, i32) {
    %c0_i32 = arith.constant 0 : i32
    %c0_i32_0 = arith.constant 0 : i32
    %c0_i32_1 = arith.constant 0 : i32
    return %c0_i32, %c0_i32_0 : i32, i32
  }
  func.func @transform_11(%arg0: i32) -> (i32, i32, i32) {
    %c0_i32 = arith.constant 0 : i32
    %c0_i32_0 = arith.constant 0 : i32
    %c0_i32_1 = arith.constant 0 : i32
    return %arg0, %c0_i32, %c0_i32_0 : i32, i32, i32
  }
}

</mosaic_0001>

<llo_original>
// kernel: tpu_custom_call.1
$region0: #{tpu_custom_call.1}
  #allocation0 [shape = 'u32[]', space=smem, size = 0x4, offset = 0x4, fixed_abs, tag = 'smem constant byte address 0x4 - core index']
  #allocation1 [shape = 'u32[144,128]{1,0:T(1,128)}', space=vmem, size = 0x12000, scoped, tag = 'internal scratch']
  %s0 = inlined_call_operand.hbm [shape: bf16[2,8,32], index: 0, kind: input, shape index: {}]
  %s1 = inlined_call_operand.hbm [shape: bf16[2,8,32], index: 1, kind: input, shape index: {}]
  %s2 = inlined_call_operand.hbm [shape: bf16[2,8,32], index: 2, kind: input, shape index: {}]
  %s3 = inlined_call_operand.hbm [shape: bf16[32,32], index: 3, kind: input, shape index: {}]
  %s4 = inlined_call_operand.vmem [shape: f32[1,32], index: 4, kind: input, shape index: {}]
  %s5 = inlined_call_operand.vmem [shape: bf16[32,32], index: 5, kind: input, shape index: {}]
  %s6 = inlined_call_operand.vmem [shape: f32[1,32], index: 6, kind: input, shape index: {}]
  %s7 = inlined_call_operand.hbm [shape: bf16[32,32], index: 7, kind: input, shape index: {}]
  %s8 = inlined_call_operand.hbm [shape: f32[1,32], index: 8, kind: input, shape index: {}]
  %s9 = inlined_call_operand.vmem [shape: bf16[4,8,32], index: 9, kind: input, shape index: {}]
  %s10 = inlined_call_operand.vmem [shape: f32[1,32], index: 10, kind: input, shape index: {}]
  %s11 = inlined_call_operand.vmem [shape: bf16[2,1,256], index: 11, kind: output, shape index: {}]
  %s12 = sld [smem:[#allocation0]]
  $region101: #{tpu_custom_call.1} parent=0
    _
  %s14 = ssub.s32 1, %s12
  %s15 = scalar_select 0, %s14, %s12
  $region1: #{tpu_custom_call.1} parent=0
    #allocation2 [shape = 'u8[4096]{0}', space=vmem, size = 0x1000, scoped, tag = 'input window, operand 0']
    #allocation3 [shape = 's32[2]{0}', space=sflag, size = 0x8, scoped, tag = 'scoped memory for tpu_custom_call.1']
    #allocation4 [shape = 'u8[4096]{0}', space=vmem, size = 0x1000, scoped, tag = 'input window, operand 1']
    #allocation5 [shape = 's32[2]{0}', space=sflag, size = 0x8, scoped, tag = 'scoped memory for tpu_custom_call.1']
    #allocation6 [shape = 'u8[4096]{0}', space=vmem, size = 0x1000, scoped, tag = 'input window, operand 2']
    #allocation7 [shape = 'u8[8192]{0}', space=vmem, size = 0x2000, scoped, tag = 'input window, operand 3, single buffered']
    #allocation8 [shape = 's32[1]{0}', space=sflag, size = 0x4, scoped, tag = 'scoped memory for tpu_custom_call.1']
    #allocation9 [shape = 'u8[8192]{0}', space=vmem, size = 0x2000, scoped, tag = 'input window, operand 7, single buffered']
    #allocation10 [shape = 'u8[512]{0}', space=vmem, size = 0x400, scoped, tag = 'input window, operand 8, single buffered']
    #allocation11 [shape = 's32[1]{0}', space=sflag, size = 0x4, scoped, tag = 'scoped memory for tpu_custom_call.1']
    %16 = vsyncpa [#allocation3], 0
    %s17 = scalar_lea.sflag [#allocation3], 1
    %18 = vsyncpa %s17, 0
    %19 = vsyncpa [#allocation5], 0
    %s20 = scalar_lea.sflag [#allocation5], 1
    %21 = vsyncpa %s20, 0
    %22 = vsyncpa [#allocation8], 0
    %23 = vsyncpa [#allocation11], 0
    loop: start=0, step=1, limit=4
    $region2: #{tpu_custom_call.1} parent=1 // loop_pre_header
      _
    $region3: #{tpu_custom_call.1} parent=1 // loop_header
      %s25 = sphi 0, %s29
      %p26 = scmp.ge.s32.totalorder %s25, 4
      %s35 = sphi 0, %s37
      %s38 = sphi 0, %s35
      %s39 = sphi 0, %s38
      %s55 = sphi 0, %s39
      %s61 = sphi 0, %s63
      %s64 = sphi 0, %s61
      %s65 = sphi 0, %s64
      %s81 = sphi 0, %s65
      %s87 = sphi 0, %s89
      %s90 = sphi 0, %s87
      %s91 = sphi 0, %s90
      %s107 = sphi 0, %s91
      %s111 = sphi 0, %s111
      %s113 = sphi 0, %s111
      %s114 = sphi 0, %s113
      %s128 = sphi 0, %s114
      %s132 = sphi 0, %s132
      %s134 = sphi 0, %s132
      %s135 = sphi 0, %s134
      %s149 = sphi 0, %s135
      %s153 = sphi 0, %s153
      %s155 = sphi 0, %s153
      %s156 = sphi 0, %s155
      %s170 = sphi 0, %s156
      %s174 = sphi 0, %s174
      %s176 = sphi 0, %s174
      %s177 = sphi 0, %s176
      %s191 = sphi 0, %s177
      %s195 = sphi 0, %s195
      %s197 = sphi 0, %s195
      %s198 = sphi 0, %s197
      %s212 = sphi 0, %s198
      %s216 = sphi 0, %s216
      %s218 = sphi 0, %s216
      %s219 = sphi 0, %s218
      %s233 = sphi 0, %s219
      %s237 = sphi 0, %s237
      %s239 = sphi 0, %s237
      %s240 = sphi 0, %s239
      %s254 = sphi 0, %s240
      %s258 = sphi 0, %s258
      %s260 = sphi 0, %s258
      %s261 = sphi 0, %s260
      %s275 = sphi 0, %s261
      %s281 = sphi 0, %s283
      %s284 = sphi 0, %s281
      %s285 = sphi 0, %s284
      %s301 = sphi 0, %s285
    $region4: #{tpu_custom_call.1} parent=1 // loop_header_branch
      %28 = sbr.rel (%p26) target = $region8
    $region5: #{tpu_custom_call.1} parent=1 // loop_body
      %s30 = ssub.s32 %s25, 1
      %s31 = ssub.s32 %s25, 2
      %s32 = sadd.s32 %s25, 1
      %s33 = ssub.s32 %s25, %s32
      %p34 = scmp.eq.s32.totalorder %s33, 0
      %s36 = sadd.s32 %s35, 1
      %s37 = scalar_select %p34, %s35, %s36
      %p40 = pneg %p34
      %p41 = scmp.eq.s32.totalorder %s25, 1
      %p42 = por %p40, %p41
      %p43 = scmp.ne.s32.totalorder %s35, %s38
      %p44 = scmp.eq.s32.totalorder %s25, 0
      %p45 = por %p43, %p44
      %p46 = scmp.ne.s32.totalorder %s35, %s38
      %p47 = scmp.eq.s32.totalorder %s30, 1
      %p48 = por %p46, %p47
      %p49 = scmp.ne.s32.totalorder %s38, %s39
      %p50 = scmp.eq.s32.totalorder %s30, 0
      %p51 = por %p49, %p50
      %p52 = scmp.ne.s32.totalorder %s38, %s39
      %p53 = scmp.eq.s32.totalorder %s31, 1
      %p54 = por %p52, %p53
      %p56 = scmp.ne.s32.totalorder %s39, %s55
      %p57 = scmp.eq.s32.totalorder %s31, 0
      %p58 = por %p56, %p57
      %s59 = ssub.s32 %s25, %s32
      %p60 = scmp.eq.s32.totalorder %s59, 0
      %s62 = sadd.s32 %s61, 1
      %s63 = scalar_select %p60, %s61, %s62
      %p66 = pneg %p60
      %p67 = scmp.eq.s32.totalorder %s25, 1
      %p68 = por %p66, %p67
      %p69 = scmp.ne.s32.totalorder %s61, %s64
      %p70 = scmp.eq.s32.totalorder %s25, 0
      %p71 = por %p69, %p70
      %p72 = scmp.ne.s32.totalorder %s61, %s64
      %p73 = scmp.eq.s32.totalorder %s30, 1
      %p74 = por %p72, %p73
      %p75 = scmp.ne.s32.totalorder %s64, %s65
      %p76 = scmp.eq.s32.totalorder %s30, 0
      %p77 = por %p75, %p76
      %p78 = scmp.ne.s32.totalorder %s64, %s65
      %p79 = scmp.eq.s32.totalorder %s31, 1
      %p80 = por %p78, %p79
      %p82 = scmp.ne.s32.totalorder %s65, %s81
      %p83 = scmp.eq.s32.totalorder %s31, 0
      %p84 = por %p82, %p83
      %s85 = ssub.s32 %s25, %s32
      %p86 = scmp.eq.s32.totalorder %s85, 0
      %s88 = sadd.s32 %s87, 1
      %s89 = scalar_select %p86, %s87, %s88
      %p92 = pneg %p86
      %p93 = scmp.eq.s32.totalorder %s25, 1
      %p94 = por %p92, %p93
      %p95 = scmp.ne.s32.totalorder %s87, %s90
      %p96 = scmp.eq.s32.totalorder %s25, 0
      %p97 = por %p95, %p96
      %p98 = scmp.ne.s32.totalorder %s87, %s90
      %p99 = scmp.eq.s32.totalorder %s30, 1
      %p100 = por %p98, %p99
      %p101 = scmp.ne.s32.totalorder %s90, %s91
      %p102 = scmp.eq.s32.totalorder %s30, 0
      %p103 = por %p101, %p102
      %p104 = scmp.ne.s32.totalorder %s90, %s91
      %p105 = scmp.eq.s32.totalorder %s31, 1
      %p106 = por %p104, %p105
      %p108 = scmp.ne.s32.totalorder %s91, %s107
      %p109 = scmp.eq.s32.totalorder %s31, 0
      %p110 = por %p108, %p109
      %s112 = sadd.s32 %s111, 1
      %p115 = scmp.eq.s32.totalorder %s25, 1
      %p116 = scmp.ne.s32.totalorder %s111, %s113
      %p117 = scmp.eq.s32.totalorder %s25, 0
      %p118 = por %p116, %p117
      %p119 = scmp.ne.s32.totalorder %s111, %s113
      %p120 = scmp.eq.s32.totalorder %s30, 1
      %p121 = por %p119, %p120
      %p122 = scmp.ne.s32.totalorder %s113, %s114
      %p123 = scmp.eq.s32.totalorder %s30, 0
      %p124 = por %p122, %p123
      %p125 = scmp.ne.s32.totalorder %s113, %s114
      %p126 = scmp.eq.s32.totalorder %s31, 1
      %p127 = por %p125, %p126
      %p129 = scmp.ne.s32.totalorder %s114, %s128
      %p130 = scmp.eq.s32.totalorder %s31, 0
      %p131 = por %p129, %p130
      %s133 = sadd.s32 %s132, 1
      %p136 = scmp.eq.s32.totalorder %s25, 1
      %p137 = scmp.ne.s32.totalorder %s132, %s134
      %p138 = scmp.eq.s32.totalorder %s25, 0
      %p139 = por %p137, %p138
      %p140 = scmp.ne.s32.totalorder %s132, %s134
      %p141 = scmp.eq.s32.totalorder %s30, 1
      %p142 = por %p140, %p141
      %p143 = scmp.ne.s32.totalorder %s134, %s135
      %p144 = scmp.eq.s32.totalorder %s30, 0
      %p145 = por %p143, %p144
      %p146 = scmp.ne.s32.totalorder %s134, %s135
      %p147 = scmp.eq.s32.totalorder %s31, 1
      %p148 = por %p146, %p147
      %p150 = scmp.ne.s32.totalorder %s135, %s149
      %p151 = scmp.eq.s32.totalorder %s31, 0
      %p152 = por %p150, %p151
      %s154 = sadd.s32 %s153, 1
      %p157 = scmp.eq.s32.totalorder %s25, 1
      %p158 = scmp.ne.s32.totalorder %s153, %s155
      %p159 = scmp.eq.s32.totalorder %s25, 0
      %p160 = por %p158, %p159
      %p161 = scmp.ne.s32.totalorder %s153, %s155
      %p162 = scmp.eq.s32.totalorder %s30, 1
      %p163 = por %p161, %p162
      %p164 = scmp.ne.s32.totalorder %s155, %s156
      %p165 = scmp.eq.s32.totalorder %s30, 0
      %p166 = por %p164, %p165
      %p167 = scmp.ne.s32.totalorder %s155, %s156
      %p168 = scmp.eq.s32.totalorder %s31, 1
      %p169 = por %p167, %p168
      %p171 = scmp.ne.s32.totalorder %s156, %s170
      %p172 = scmp.eq.s32.totalorder %s31, 0
      %p173 = por %p171, %p172
      %s175 = sadd.s32 %s174, 1
      %p178 = scmp.eq.s32.totalorder %s25, 1
      %p179 = scmp.ne.s32.totalorder %s174, %s176
      %p180 = scmp.eq.s32.totalorder %s25, 0
      %p181 = por %p179, %p180
      %p182 = scmp.ne.s32.totalorder %s174, %s176
      %p183 = scmp.eq.s32.totalorder %s30, 1
      %p184 = por %p182, %p183
      %p185 = scmp.ne.s32.totalorder %s176, %s177
      %p186 = scmp.eq.s32.totalorder %s30, 0
      %p187 = por %p185, %p186
      %p188 = scmp.ne.s32.totalorder %s176, %s177
      %p189 = scmp.eq.s32.totalorder %s31, 1
      %p190 = por %p188, %p189
      %p192 = scmp.ne.s32.totalorder %s177, %s191
      %p193 = scmp.eq.s32.totalorder %s31, 0
      %p194 = por %p192, %p193
      %s196 = sadd.s32 %s195, 1
      %p199 = scmp.eq.s32.totalorder %s25, 1
      %p200 = scmp.ne.s32.totalorder %s195, %s197
      %p201 = scmp.eq.s32.totalorder %s25, 0
      %p202 = por %p200, %p201
      %p203 = scmp.ne.s32.totalorder %s195, %s197
      %p204 = scmp.eq.s32.totalorder %s30, 1
      %p205 = por %p203, %p204
      %p206 = scmp.ne.s32.totalorder %s197, %s198
      %p207 = scmp.eq.s32.totalorder %s30, 0
      %p208 = por %p206, %p207
      %p209 = scmp.ne.s32.totalorder %s197, %s198
      %p210 = scmp.eq.s32.totalorder %s31, 1
      %p211 = por %p209, %p210
      %p213 = scmp.ne.s32.totalorder %s198, %s212
      %p214 = scmp.eq.s32.totalorder %s31, 0
      %p215 = por %p213, %p214
      %s217 = sadd.s32 %s216, 1
      %p220 = scmp.eq.s32.totalorder %s25, 1
      %p221 = scmp.ne.s32.totalorder %s216, %s218
      %p222 = scmp.eq.s32.totalorder %s25, 0
      %p223 = por %p221, %p222
      %p224 = scmp.ne.s32.totalorder %s216, %s218
      %p225 = scmp.eq.s32.totalorder %s30, 1
      %p226 = por %p224, %p225
      %p227 = scmp.ne.s32.totalorder %s218, %s219
      %p228 = scmp.eq.s32.totalorder %s30, 0
      %p229 = por %p227, %p228
      %p230 = scmp.ne.s32.totalorder %s218, %s219
      %p231 = scmp.eq.s32.totalorder %s31, 1
      %p232 = por %p230, %p231
      %p234 = scmp.ne.s32.totalorder %s219, %s233
      %p235 = scmp.eq.s32.totalorder %s31, 0
      %p236 = por %p234, %p235
      %s238 = sadd.s32 %s237, 1
      %p241 = scmp.eq.s32.totalorder %s25, 1
      %p242 = scmp.ne.s32.totalorder %s237, %s239
      %p243 = scmp.eq.s32.totalorder %s25, 0
      %p244 = por %p242, %p243
      %p245 = scmp.ne.s32.totalorder %s237, %s239
      %p246 = scmp.eq.s32.totalorder %s30, 1
      %p247 = por %p245, %p246
      %p248 = scmp.ne.s32.totalorder %s239, %s240
      %p249 = scmp.eq.s32.totalorder %s30, 0
      %p250 = por %p248, %p249
      %p251 = scmp.ne.s32.totalorder %s239, %s240
      %p252 = scmp.eq.s32.totalorder %s31, 1
      %p253 = por %p251, %p252
      %p255 = scmp.ne.s32.totalorder %s240, %s254
      %p256 = scmp.eq.s32.totalorder %s31, 0
      %p257 = por %p255, %p256
      %s259 = sadd.s32 %s258, 1
      %p262 = scmp.eq.s32.totalorder %s25, 1
      %p263 = scmp.ne.s32.totalorder %s258, %s260
      %p264 = scmp.eq.s32.totalorder %s25, 0
      %p265 = por %p263, %p264
      %p266 = scmp.ne.s32.totalorder %s258, %s260
      %p267 = scmp.eq.s32.totalorder %s30, 1
      %p268 = por %p266, %p267
      %p269 = scmp.ne.s32.totalorder %s260, %s261
      %p270 = scmp.eq.s32.totalorder %s30, 0
      %p271 = por %p269, %p270
      %p272 = scmp.ne.s32.totalorder %s260, %s261
      %p273 = scmp.eq.s32.totalorder %s31, 1
      %p274 = por %p272, %p273
      %p276 = scmp.ne.s32.totalorder %s261, %s275
      %p277 = scmp.eq.s32.totalorder %s31, 0
      %p278 = por %p276, %p277
      %s279 = ssub.s32 %s25, %s32
      %p280 = scmp.eq.s32.totalorder %s279, 0
      %s282 = sadd.s32 %s281, 1
      %s283 = scalar_select %p280, %s281, %s282
      %p286 = pneg %p280
      %p287 = scmp.eq.s32.totalorder %s25, 1
      %p288 = por %p286, %p287
      %p289 = scmp.ne.s32.totalorder %s281, %s284
      %p290 = scmp.eq.s32.totalorder %s25, 0
      %p291 = por %p289, %p290
      %p292 = scmp.ne.s32.totalorder %s281, %s284
      %p293 = scmp.eq.s32.totalorder %s30, 1
      %p294 = por %p292, %p293
      %p295 = scmp.ne.s32.totalorder %s284, %s285
      %p296 = scmp.eq.s32.totalorder %s30, 0
      %p297 = por %p295, %p296
      %p298 = scmp.ne.s32.totalorder %s284, %s285
      %p299 = scmp.eq.s32.totalorder %s31, 1
      %p300 = por %p298, %p299
      %p302 = scmp.ne.s32.totalorder %s285, %s301
      %p303 = scmp.eq.s32.totalorder %s31, 0
      %p304 = por %p302, %p303
      %p305 = scmp.le.s32.totalorder 1, %s25
      %p306 = scmp.lt.s32.totalorder %s25, 3
      %p307 = pnand %p305, %p306
      %p308 = pneg %p307
      // Predicated region
      $region9: #{tpu_custom_call.1} parent=5 // pred_check
        _
      $region10: #{tpu_custom_call.1} parent=5 // pred_check_branch
        %310 = sbr.rel (%p307) target = $region12
      $region11: #{tpu_custom_call.1} parent=5 // pred_region
        %s311 = ssub.s32 %s25, 1
        // Predicated region
        $region13: #{tpu_custom_call.1} parent=11 // pred_check
          %p312 = pneg %p124
        $region14: #{tpu_custom_call.1} parent=11 // pred_check_branch
          %314 = sbr.rel (%p312) target = $region16
        $region15: #{tpu_custom_call.1} parent=11 // pred_region
          %s316 = ssub.s32 256, 256
          %317 = vsyncadd [#allocation8], %s316
          %s318 = sshll.u32 [#allocation7], 4
          %s319 = int_to_ptr.vmem [resolvable:$true] %s318
          %324 = dma.hbm_to_vmem [thread:$0]  %s3, 256, %s319, [#allocation8], 64, 64, 4
        $region16: #{tpu_custom_call.1} parent=11 // pred_fallthru
          _
        // Predicated region
        $region17: #{tpu_custom_call.1} parent=11 // pred_check
          %p325 = pneg %p145
        $region18: #{tpu_custom_call.1} parent=11 // pred_check_branch
          %327 = sbr.rel (%p325) target = $region20
        $region19: #{tpu_custom_call.1} parent=11 // pred_region
          _
        $region20: #{tpu_custom_call.1} parent=11 // pred_fallthru
          _
        // Predicated region
        $region21: #{tpu_custom_call.1} parent=11 // pred_check
          %p328 = pneg %p166
        $region22: #{tpu_custom_call.1} parent=11 // pred_check_branch
          %330 = sbr.rel (%p328) target = $region24
        $region23: #{tpu_custom_call.1} parent=11 // pred_region
          _
        $region24: #{tpu_custom_call.1} parent=11 // pred_fallthru
          _
        // Predicated region
        $region25: #{tpu_custom_call.1} parent=11 // pred_check
          %p331 = pneg %p187
        $region26: #{tpu_custom_call.1} parent=11 // pred_check_branch
          %333 = sbr.rel (%p331) target = $region28
        $region27: #{tpu_custom_call.1} parent=11 // pred_region
          _
        $region28: #{tpu_custom_call.1} parent=11 // pred_fallthru
          _
        // Predicated region
        $region29: #{tpu_custom_call.1} parent=11 // pred_check
          %p334 = pneg %p208
        $region30: #{tpu_custom_call.1} parent=11 // pred_check_branch
          %336 = sbr.rel (%p334) target = $region32
        $region31: #{tpu_custom_call.1} parent=11 // pred_region
          %s338 = ssub.s32 256, 256
          %339 = vsyncadd [#allocation8], %s338
          %s340 = sshll.u32 [#allocation9], 4
          %s341 = int_to_ptr.vmem [resolvable:$true] %s340
          %346 = dma.hbm_to_vmem [thread:$0]  %s7, 256, %s341, [#allocation8], 64, 64, 4
        $region32: #{tpu_custom_call.1} parent=11 // pred_fallthru
          _
        // Predicated region
        $region33: #{tpu_custom_call.1} parent=11 // pred_check
          %p347 = pneg %p229
        $region34: #{tpu_custom_call.1} parent=11 // pred_check_branch
          %349 = sbr.rel (%p347) target = $region36
        $region35: #{tpu_custom_call.1} parent=11 // pred_region
          %s351 = ssub.s32 16, 16
          %352 = vsyncadd [#allocation11], %s351
          %s354 = sshll.u32 [#allocation10], 4
          %s355 = int_to_ptr.vmem [resolvable:$true] %s354
          %357 = dma.hbm_to_vmem [thread:$0]  %s8, 16, %s355, [#allocation11]
        $region36: #{tpu_custom_call.1} parent=11 // pred_fallthru
          _
        // Predicated region
        $region37: #{tpu_custom_call.1} parent=11 // pred_check
          %p358 = pneg %p250
        $region38: #{tpu_custom_call.1} parent=11 // pred_check_branch
          %360 = sbr.rel (%p358) target = $region40
        $region39: #{tpu_custom_call.1} parent=11 // pred_region
          _
        $region40: #{tpu_custom_call.1} parent=11 // pred_fallthru
          _
        // Predicated region
        $region41: #{tpu_custom_call.1} parent=11 // pred_check
          %p361 = pneg %p271
        $region42: #{tpu_custom_call.1} parent=11 // pred_check_branch
          %363 = sbr.rel (%p361) target = $region44
        $region43: #{tpu_custom_call.1} parent=11 // pred_region
          _
        $region44: #{tpu_custom_call.1} parent=11 // pred_fallthru
          _
      $region12: #{tpu_custom_call.1} parent=5 // pred_fallthru
        _
      %p364 = scmp.lt.s32.totalorder %s25, 2
      // Predicated region
      $region45: #{tpu_custom_call.1} parent=5 // pred_check
        %p365 = pneg %p364
      $region46: #{tpu_custom_call.1} parent=5 // pred_check_branch
        %367 = sbr.rel (%p365) target = $region48
      $region47: #{tpu_custom_call.1} parent=5 // pred_region
        // Predicated region
        $region49: #{tpu_custom_call.1} parent=47 // pred_check
          %p368 = pneg %p45
        $region50: #{tpu_custom_call.1} parent=47 // pred_check_branch
          %370 = sbr.rel (%p368) target = $region52
        $region51: #{tpu_custom_call.1} parent=47 // pred_region
          %s371 = sand.u32 %s35, 1
          %s372 = scalar_lea.sflag [#allocation3], %s371
          %s373 = sand.u32 %s35, 1
          %s374 = smul.addr %s373, 4
          %s375 = scalar_lea.vmem [#allocation2], %s374
          %s377 = ssub.s32 64, 64
          %378 = vsyncadd %s372, %s377
          %s379 = smul.addr %s25, 64
          %s380 = scalar_lea.hbm %s0, %s379
          %s382 = sshll.u32 %s375, 4
          %s383 = int_to_ptr.vmem [resolvable:$true] %s382
          %385 = dma.hbm_to_vmem [thread:$0]  %s380, 64, %s383, %s372
        $region52: #{tpu_custom_call.1} parent=47 // pred_fallthru
          _
        // Predicated region
        $region53: #{tpu_custom_call.1} parent=47 // pred_check
          %p386 = pneg %p71
        $region54: #{tpu_custom_call.1} parent=47 // pred_check_branch
          %388 = sbr.rel (%p386) target = $region56
        $region55: #{tpu_custom_call.1} parent=47 // pred_region
          %s389 = sand.u32 %s25, 1
          %s390 = scalar_lea.sflag [#allocation5], %s389
          %s391 = sand.u32 %s61, 1
          %s392 = smul.addr %s391, 4
          %s393 = scalar_lea.vmem [#allocation4], %s392
          %s395 = ssub.s32 64, 64
          %396 = vsyncadd %s390, %s395
          %s397 = smul.addr %s25, 64
          %s398 = scalar_lea.hbm %s1, %s397
          %s400 = sshll.u32 %s393, 4
          %s401 = int_to_ptr.vmem [resolvable:$true] %s400
          %403 = dma.hbm_to_vmem [thread:$0]  %s398, 64, %s401, %s390
        $region56: #{tpu_custom_call.1} parent=47 // pred_fallthru
          _
        // Predicated region
        $region57: #{tpu_custom_call.1} parent=47 // pred_check
          %p404 = pneg %p97
        $region58: #{tpu_custom_call.1} parent=47 // pred_check_branch
          %406 = sbr.rel (%p404) target = $region60
        $region59: #{tpu_custom_call.1} parent=47 // pred_region
          %s407 = sand.u32 %s25, 1
          %s408 = scalar_lea.sflag [#allocation5], %s407
          %s409 = sand.u32 %s87, 1
          %s410 = smul.addr %s409, 4
          %s411 = scalar_lea.vmem [#allocation6], %s410
          %s413 = ssub.s32 64, 64
          %414 = vsyncadd %s408, %s413
          %s415 = smul.addr %s25, 64
          %s416 = scalar_lea.hbm %s2, %s415
          %s418 = sshll.u32 %s411, 4
          %s419 = int_to_ptr.vmem [resolvable:$true] %s418
          %421 = dma.hbm_to_vmem [thread:$0]  %s416, 64, %s419, %s408
        $region60: #{tpu_custom_call.1} parent=47 // pred_fallthru
          _
      $region48: #{tpu_custom_call.1} parent=5 // pred_fallthru
        _
      %p422 = scmp.le.s32.totalorder 1, %s25
      %p423 = scmp.lt.s32.totalorder %s25, 3
      %p424 = pnand %p422, %p423
      %p425 = pneg %p424
      // Predicated region
      $region61: #{tpu_custom_call.1} parent=5 // pred_check
        _
      $region62: #{tpu_custom_call.1} parent=5 // pred_check_branch
        %427 = sbr.rel (%p424) target = $region64
      $region63: #{tpu_custom_call.1} parent=5 // pred_region
        %s428 = ssub.s32 %s25, 1
        %s429 = sand.u32 %s38, 1
        %s430 = scalar_lea.sflag [#allocation3], %s429
        %s431 = sand.u32 %s38, 1
        %s432 = smul.addr %s431, 4
        %s433 = scalar_lea.vmem [#allocation2], %s432
        // Predicated region
        $region65: #{tpu_custom_call.1} parent=63 // pred_check
          %p434 = pneg %p51
        $region66: #{tpu_custom_call.1} parent=63 // pred_check_branch
          %436 = sbr.rel (%p434) target = $region68
        $region67: #{tpu_custom_call.1} parent=63 // pred_region
          %437 = dma.done %s430, 64
        $region68: #{tpu_custom_call.1} parent=63 // pred_fallthru
          _
        %s438 = sand.u32 %s30, 1
        %s439 = scalar_lea.sflag [#allocation5], %s438
        %s440 = sand.u32 %s64, 1
        %s441 = smul.addr %s440, 4
        %s442 = scalar_lea.vmem [#allocation4], %s441
        // Predicated region
        $region69: #{tpu_custom_call.1} parent=63 // pred_check
          %p443 = pneg %p77
        $region70: #{tpu_custom_call.1} parent=63 // pred_check_branch
          %445 = sbr.rel (%p443) target = $region72
        $region71: #{tpu_custom_call.1} parent=63 // pred_region
          %446 = dma.done %s439, 64
        $region72: #{tpu_custom_call.1} parent=63 // pred_fallthru
          _
        %s447 = sand.u32 %s30, 1
        %s448 = scalar_lea.sflag [#allocation5], %s447
        %s449 = sand.u32 %s90, 1
        %s450 = smul.addr %s449, 4
        %s451 = scalar_lea.vmem [#allocation6], %s450
        // Predicated region
        $region73: #{tpu_custom_call.1} parent=63 // pred_check
          %p452 = pneg %p103
        $region74: #{tpu_custom_call.1} parent=63 // pred_check_branch
          %454 = sbr.rel (%p452) target = $region76
        $region75: #{tpu_custom_call.1} parent=63 // pred_region
          %455 = dma.done %s448, 64
        $region76: #{tpu_custom_call.1} parent=63 // pred_fallthru
          _
        // Predicated region
        $region77: #{tpu_custom_call.1} parent=63 // pred_check
          %p456 = pneg %p124
        $region78: #{tpu_custom_call.1} parent=63 // pred_check_branch
          %458 = sbr.rel (%p456) target = $region80
        $region79: #{tpu_custom_call.1} parent=63 // pred_region
          %459 = dma.done [#allocation8], 256
        $region80: #{tpu_custom_call.1} parent=63 // pred_fallthru
          _
        // Predicated region
        $region81: #{tpu_custom_call.1} parent=63 // pred_check
          %p460 = pneg %p208
        $region82: #{tpu_custom_call.1} parent=63 // pred_check_branch
          %462 = sbr.rel (%p460) target = $region84
        $region83: #{tpu_custom_call.1} parent=63 // pred_region
          %463 = dma.done [#allocation8], 256
        $region84: #{tpu_custom_call.1} parent=63 // pred_fallthru
          _
        // Predicated region
        $region85: #{tpu_custom_call.1} parent=63 // pred_check
          %p464 = pneg %p229
        $region86: #{tpu_custom_call.1} parent=63 // pred_check_branch
          %466 = sbr.rel (%p464) target = $region88
        $region87: #{tpu_custom_call.1} parent=63 // pred_region
          %467 = dma.done [#allocation11], 16
        $region88: #{tpu_custom_call.1} parent=63 // pred_fallthru
          _
        %s468 = sand.u32 %s38, 1
        %s469 = scalar_lea.sflag [#allocation3], %s468
        %s470 = sand.u32 %s38, 1
        %s471 = smul.addr %s470, 4
        %s472 = scalar_lea.vmem [#allocation2], %s471
        %p473 = pneg %p51
        %p474 = pneg %p48
        %s475 = sand.u32 %s30, 1
        %s476 = scalar_lea.sflag [#allocation5], %s475
        %s477 = sand.u32 %s64, 1
        %s478 = smul.addr %s477, 4
        %s479 = scalar_lea.vmem [#allocation4], %s478
        %p480 = pneg %p77
        %p481 = pneg %p74
        %s482 = sand.u32 %s30, 1
        %s483 = scalar_lea.sflag [#allocation5], %s482
        %s484 = sand.u32 %s90, 1
        %s485 = smul.addr %s484, 4
        %s486 = scalar_lea.vmem [#allocation6], %s485
        %p487 = pneg %p103
        %p488 = pneg %p100
        %p489 = pneg %p124
        %p490 = pneg %p121
        %p491 = pneg %p145
        %p492 = pneg %p142
        %p493 = pneg %p166
        %p494 = pneg %p163
        %p495 = pneg %p187
        %p496 = pneg %p184
        %p497 = pneg %p208
        %p498 = pneg %p205
        %p499 = pneg %p229
        %p500 = pneg %p226
        %p501 = pneg %p250
        %p502 = pneg %p247
        %p503 = pneg %p271
        %p504 = pneg %p268
        %p505 = pneg %p297
        %p506 = pneg %p294
        %p507 = scmp.lt.s32.totalorder %s30, 1
        %s508 = scalar_select %p507, %s30, 1
        %s509 = smul.addr %s508, 2
        %s510 = scalar_lea.vmem %s11, %s509
        %p511 = scmp.lt.s32.totalorder %s30, 1
        %s512 = scalar_select %p511, %s30, 1
        %s513 = smul.addr %s512, 2
        %s514 = scalar_lea.vmem %s11, %s513
        %v516 = vld [vmem:[%s433] sm:$0xf]
        %v517 = vld [vmem:[%s442] sm:$0xf]
        %v518 = vld [vmem:[%s451] sm:$0xf]
        %v519 = vld [vmem:[#allocation7] sm:$0xf]
        %v520 = vld [vmem:[#allocation7 + $0x4] sm:$0xf]
        %v521 = vld [vmem:[#allocation7 + $0x8] sm:$0xf]
        %v522 = vld [vmem:[#allocation7 + $0xc] sm:$0xf]
        %v523 = vld [vmem:[%s4] sm:$0x1]
        %v525 = vlaneseq
        %v526 = vshrl.u32 %v525, 7
        %v527 = vsub.s32 0, %v526
        %v528 = vrot.slane %v523, %v527
        %v534 = vunpack.c.l.b16 %v519
        %v535 = vunpack.c.l.b16 %v520
        %v536 = vunpack.c.l.b16 %v521
        %v537 = vunpack.c.l.b16 %v522
        %v538 = vpack.c.b16 %v535, %v534
        %v539 = vpack.c.b16 %v537, %v536
        %vm542 = vcmask 261120
        %v544 = vsel %vm542, %v516, 0
        %546 = vmatprep.subr.bf16.mxu0 0
        %547 = vmatpush1.bf16.msra.mxu0 %v538
        %548 = vmatprep.subr.bf16.mxu0 0
        %549 = vmatpush1.bf16.msra.mxu0 %v539
        %550 = vmatprep.subr.bf16.mxu0 0
        %551 = vmatpush1.bf16.msra.mxu0 0
        %552 = vmatprep.subr.bf16.mxu0 0
        %553 = vmatpush1.bf16.msra.mxu0 0
        %554 = vmatprep.subr.bf16.mxu0 0
        %555 = vmatpush1.bf16.msra.mxu0 0
        %556 = vmatprep.subr.bf16.mxu0 0
        %557 = vmatpush1.bf16.msra.mxu0 0
        %558 = vmatprep.subr.bf16.mxu0 0
        %559 = vmatpush1.bf16.msra.mxu0 0
        %560 = vmatprep.subr.bf16.mxu0 0
        %561 = vmatpush1.bf16.msra.mxu0 0
        %562 = vmatprep.subr.bf16.mxu0 0
        %563 = vmatpush1.bf16.msra.mxu0 0
        %564 = vmatprep.subr.bf16.mxu0 0
        %565 = vmatpush1.bf16.msra.mxu0 0
        %566 = vmatprep.subr.bf16.mxu0 0
        %567 = vmatpush1.bf16.msra.mxu0 0
        %568 = vmatprep.subr.bf16.mxu0 0
        %569 = vmatpush1.bf16.msra.mxu0 0
        %570 = vmatprep.subr.bf16.mxu0 0
        %571 = vmatpush1.bf16.msra.mxu0 0
        %572 = vmatprep.subr.bf16.mxu0 0
        %573 = vmatpush1.bf16.msra.mxu0 0
        %574 = vmatprep.subr.bf16.mxu0 0
        %575 = vmatpush1.bf16.msra.mxu0 0
        %576 = vmatprep.subr.bf16.mxu0 0
        %577 = vmatpush1.bf16.msra.mxu0 0
        %578 = vmatprep.mubr.bf16.mxu0 0
        %579 = vmatmul.mubr.bf16.gmra.mrb[0].mxu0 %v544
        %v580 = vpop.f32.mrb[0].mxu0
        %v581 = vadd.f32 %v528, %v580
        %v582 = vpop.f32.mrb[0].mxu0
        %v583 = vpop.f32.mrb[0].mxu0
        %v584 = vpop.f32.mrb[0].mxu0
        %585 = vdwg.mxu0
        %v586 = vld [vmem:[%s5] sm:$0xf]
        %v587 = vld [vmem:[%s5 + $0x4] sm:$0xf]
        %v588 = vld [vmem:[%s5 + $0x8] sm:$0xf]
        %v589 = vld [vmem:[%s5 + $0xc] sm:$0xf]
        %v590 = vld [vmem:[%s6] sm:$0x1]
        %v592 = vlaneseq
        %v593 = vshrl.u32 %v592, 7
        %v594 = vsub.s32 0, %v593
        %v595 = vrot.slane %v590, %v594
        %v601 = vunpack.c.l.b16 %v586
        %v602 = vunpack.c.l.b16 %v587
        %v603 = vunpack.c.l.b16 %v588
        %v604 = vunpack.c.l.b16 %v589
        %v605 = vpack.c.b16 %v602, %v601
        %v606 = vpack.c.b16 %v604, %v603
        %v610 = vsel %vm542, %v517, 0
        %612 = vmatprep.subr.bf16.mxu0 0
        %613 = vmatpush1.bf16.msra.mxu0 %v605
        %614 = vmatprep.subr.bf16.mxu0 0
        %615 = vmatpush1.bf16.msra.mxu0 %v606
        %616 = vmatprep.subr.bf16.mxu0 0
        %617 = vmatpush1.bf16.msra.mxu0 0
        %618 = vmatprep.subr.bf16.mxu0 0
        %619 = vmatpush1.bf16.msra.mxu0 0
        %620 = vmatprep.subr.bf16.mxu0 0
        %621 = vmatpush1.bf16.msra.mxu0 0
        %622 = vmatprep.subr.bf16.mxu0 0
        %623 = vmatpush1.bf16.msra.mxu0 0
        %624 = vmatprep.subr.bf16.mxu0 0
        %625 = vmatpush1.bf16.msra.mxu0 0
        %626 = vmatprep.subr.bf16.mxu0 0
        %627 = vmatpush1.bf16.msra.mxu0 0
        %628 = vmatprep.subr.bf16.mxu0 0
        %629 = vmatpush1.bf16.msra.mxu0 0
        %630 = vmatprep.subr.bf16.mxu0 0
        %631 = vmatpush1.bf16.msra.mxu0 0
        %632 = vmatprep.subr.bf16.mxu0 0
        %633 = vmatpush1.bf16.msra.mxu0 0
        %634 = vmatprep.subr.bf16.mxu0 0
        %635 = vmatpush1.bf16.msra.mxu0 0
        %636 = vmatprep.subr.bf16.mxu0 0
        %637 = vmatpush1.bf16.msra.mxu0 0
        %638 = vmatprep.subr.bf16.mxu0 0
        %639 = vmatpush1.bf16.msra.mxu0 0
        %640 = vmatprep.subr.bf16.mxu0 0
        %641 = vmatpush1.bf16.msra.mxu0 0
        %642 = vmatprep.subr.bf16.mxu0 0
        %643 = vmatpush1.bf16.msra.mxu0 0
        %644 = vmatprep.mubr.bf16.mxu0 0
        %645 = vmatmul.mubr.bf16.gmra.mrb[0].mxu0 %v610
        %v646 = vpop.f32.mrb[0].mxu0
        %v647 = vadd.f32 %v595, %v646
        %v648 = vpop.f32.mrb[0].mxu0
        %v649 = vpop.f32.mrb[0].mxu0
        %v650 = vpop.f32.mrb[0].mxu0
        %651 = vdwg.mxu0
        %v652 = vld [vmem:[#allocation9] sm:$0xf]
        %v653 = vld [vmem:[#allocation9 + $0x4] sm:$0xf]
        %v654 = vld [vmem:[#allocation9 + $0x8] sm:$0xf]
        %v655 = vld [vmem:[#allocation9 + $0xc] sm:$0xf]
        %v656 = vld [vmem:[#allocation10] sm:$0x1]
        %v658 = vlaneseq
        %v659 = vshrl.u32 %v658, 7
        %v660 = vsub.s32 0, %v659
        %v661 = vrot.slane %v656, %v660
        %v667 = vunpack.c.l.b16 %v652
        %v668 = vunpack.c.l.b16 %v653
        %v669 = vunpack.c.l.b16 %v654
        %v670 = vunpack.c.l.b16 %v655
        %v671 = vpack.c.b16 %v668, %v667
        %v672 = vpack.c.b16 %v670, %v669
        %v676 = vsel %vm542, %v518, 0
        %678 = vmatprep.subr.bf16.mxu0 0
        %679 = vmatpush1.bf16.msra.mxu0 %v671
        %680 = vmatprep.subr.bf16.mxu0 0
        %681 = vmatpush1.bf16.msra.mxu0 %v672
        %682 = vmatprep.subr.bf16.mxu0 0
        %683 = vmatpush1.bf16.msra.mxu0 0
        %684 = vmatprep.subr.bf16.mxu0 0
        %685 = vmatpush1.bf16.msra.mxu0 0
        %686 = vmatprep.subr.bf16.mxu0 0
        %687 = vmatpush1.bf16.msra.mxu0 0
        %688 = vmatprep.subr.bf16.mxu0 0
        %689 = vmatpush1.bf16.msra.mxu0 0
        %690 = vmatprep.subr.bf16.mxu0 0
        %691 = vmatpush1.bf16.msra.mxu0 0
        %692 = vmatprep.subr.bf16.mxu0 0
        %693 = vmatpush1.bf16.msra.mxu0 0
        %694 = vmatprep.subr.bf16.mxu0 0
        %695 = vmatpush1.bf16.msra.mxu0 0
        %696 = vmatprep.subr.bf16.mxu0 0
        %697 = vmatpush1.bf16.msra.mxu0 0
        %698 = vmatprep.subr.bf16.mxu0 0
        %699 = vmatpush1.bf16.msra.mxu0 0
        %700 = vmatprep.subr.bf16.mxu0 0
        %701 = vmatpush1.bf16.msra.mxu0 0
        %702 = vmatprep.subr.bf16.mxu0 0
        %703 = vmatpush1.bf16.msra.mxu0 0
        %704 = vmatprep.subr.bf16.mxu0 0
        %705 = vmatpush1.bf16.msra.mxu0 0
        %706 = vmatprep.subr.bf16.mxu0 0
        %707 = vmatpush1.bf16.msra.mxu0 0
        %708 = vmatprep.subr.bf16.mxu0 0
        %709 = vmatpush1.bf16.msra.mxu0 0
        %710 = vmatprep.mubr.bf16.mxu0 0
        %711 = vmatmul.mubr.bf16.gmra.mrb[0].mxu0 %v676
        %v712 = vpop.f32.mrb[0].mxu0
        %v713 = vadd.f32 %v661, %v712
        %v714 = vpop.f32.mrb[0].mxu0
        %v715 = vpop.f32.mrb[0].mxu0
        %v716 = vpop.f32.mrb[0].mxu0
        %717 = vdwg.mxu0
        %v718 = vmul.f32 %v581, 0.35355338
        %v719 = vpack.c.bf16 %v718, %v718
        %v720 = vpack.c.bf16 %v647, %v647
        %v721 = vpack.c.bf16 %v713, %v713
        %v722 = vlaneseq
        %v723 = vshrl.u32 %v722, 7
        %v724 = vlaneseq
        %v725 = vand.u32 %v724, 127
        %vm726 = vcmp.le.s32.totalorder %v725, %v723
        %v727 = vsel %vm726, 0.0, -1e+09
        %vm728 = vcmask 64512
        %v730 = vsel %vm728, %v719, 0
        %v733 = vsel %vm728, %v720, 0
        %735 = vmatprep.subr.bf16.mxu0 0
        %736 = vmatpush1.bf16.xpose.msra.mxu0 %v733
        %737 = vmatprep.subr.bf16.mxu0 0
        %738 = vmatpush1.bf16.xpose.msra.mxu0 0
        %739 = vmatprep.subr.bf16.mxu0 0
        %740 = vmatpush1.bf16.xpose.msra.mxu0 0
        %741 = vmatprep.subr.bf16.mxu0 0
        %742 = vmatpush1.bf16.xpose.msra.mxu0 0
        %743 = vmatprep.subr.bf16.mxu0 0
        %744 = vmatpush1.bf16.xpose.msra.mxu0 0
        %745 = vmatprep.subr.bf16.mxu0 0
        %746 = vmatpush1.bf16.xpose.msra.mxu0 0
        %747 = vmatprep.subr.bf16.mxu0 0
        %748 = vmatpush1.bf16.xpose.msra.mxu0 0
        %749 = vmatprep.subr.bf16.mxu0 0
        %750 = vmatpush1.bf16.xpose.msra.mxu0 0
        %751 = vmatprep.subr.bf16.mxu0 0
        %752 = vmatpush1.bf16.xpose.msra.mxu0 0
        %753 = vmatprep.subr.bf16.mxu0 0
        %754 = vmatpush1.bf16.xpose.msra.mxu0 0
        %755 = vmatprep.subr.bf16.mxu0 0
        %756 = vmatpush1.bf16.xpose.msra.mxu0 0
        %757 = vmatprep.subr.bf16.mxu0 0
        %758 = vmatpush1.bf16.xpose.msra.mxu0 0
        %759 = vmatprep.subr.bf16.mxu0 0
        %760 = vmatpush1.bf16.xpose.msra.mxu0 0
        %761 = vmatprep.subr.bf16.mxu0 0
        %762 = vmatpush1.bf16.xpose.msra.mxu0 0
        %763 = vmatprep.subr.bf16.mxu0 0
        %764 = vmatpush1.bf16.xpose.msra.mxu0 0
        %765 = vmatprep.subr.bf16.mxu0 0
        %766 = vmatpush1.bf16.xpose.msra.mxu0 0
        %767 = vmatprep.mubr.bf16.mxu0 0
        %768 = vmatmul.mubr.bf16.gmra.mrb[0].mxu0 %v730
        %v769 = vpop.f32.mrb[0].mxu0
        %v770 = vadd.f32 %v727, %v769
        %v771 = vpop.f32.mrb[0].mxu0
        %v772 = vpop.f32.mrb[0].mxu0
        %v773 = vpop.f32.mrb[0].mxu0
        %774 = vdwg.mxu0
        %v775 = vsel %vm728, %v770, -inf
        %776 = vmax.xlane.f32.xlu0 %v775
        %v777 = vpop.xlane.xlu0 %776
        %v778 = vsub.f32 %v770, %v777
        %v779 = vmul.f32 %v778, 1.442695
        %v780 = vpow.pop %v779
        %v781 = vsel %vm728, %v780, 0.0
        %782 = vadd.xlane.f32.xlu0 %v781
        %v783 = vpop.xlane.xlu0 %782
        %v784 = vrcp.pop %v783
        %v785 = vmul.f32 %v780, %v784
        %v786 = vpack.c.bf16 %v785, %v785
        %v788 = vsel %vm728, %v786, 0
        %vm790 = vcmask 1043456
        %v792 = vsel %vm790, %v721, 0
        %794 = vmatprep.subr.bf16.mxu0 0
        %795 = vmatpush1.bf16.msra.mxu0 %v792
        %796 = vmatprep.subr.bf16.mxu0 0
        %797 = vmatpush1.bf16.msra.mxu0 0
        %798 = vmatprep.subr.bf16.mxu0 0
        %799 = vmatpush1.bf16.msra.mxu0 0
        %800 = vmatprep.subr.bf16.mxu0 0
        %801 = vmatpush1.bf16.msra.mxu0 0
        %802 = vmatprep.subr.bf16.mxu0 0
        %803 = vmatpush1.bf16.msra.mxu0 0
        %804 = vmatprep.subr.bf16.mxu0 0
        %805 = vmatpush1.bf16.msra.mxu0 0
        %806 = vmatprep.subr.bf16.mxu0 0
        %807 = vmatpush1.bf16.msra.mxu0 0
        %808 = vmatprep.subr.bf16.mxu0 0
        %809 = vmatpush1.bf16.msra.mxu0 0
        %810 = vmatprep.subr.bf16.mxu0 0
        %811 = vmatpush1.bf16.msra.mxu0 0
        %812 = vmatprep.subr.bf16.mxu0 0
        %813 = vmatpush1.bf16.msra.mxu0 0
        %814 = vmatprep.subr.bf16.mxu0 0
        %815 = vmatpush1.bf16.msra.mxu0 0
        %816 = vmatprep.subr.bf16.mxu0 0
        %817 = vmatpush1.bf16.msra.mxu0 0
        %818 = vmatprep.subr.bf16.mxu0 0
        %819 = vmatpush1.bf16.msra.mxu0 0
        %820 = vmatprep.subr.bf16.mxu0 0
        %821 = vmatpush1.bf16.msra.mxu0 0
        %822 = vmatprep.subr.bf16.mxu0 0
        %823 = vmatpush1.bf16.msra.mxu0 0
        %824 = vmatprep.subr.bf16.mxu0 0
        %825 = vmatpush1.bf16.msra.mxu0 0
        %826 = vmatprep.mubr.bf16.mxu0 0
        %827 = vmatmul.mubr.bf16.gmra.mrb[0].mxu0 %v788
        %v828 = vpop.f32.mrb[0].mxu0
        %v829 = vadd.f32 0.0, %v828
        %v830 = vpop.f32.mrb[0].mxu0
        %v831 = vpop.f32.mrb[0].mxu0
        %v832 = vpop.f32.mrb[0].mxu0
        %833 = vdwg.mxu0
        %v834 = vpack.c.bf16 %v829, %v829
        %v835 = vld [vmem:[%s9] sm:$0xf]
        %837 = vrot.lane.b32.xlu0 %v719, 120
        %v838 = vpop.permute.xlu0 %837
        %840 = vrot.lane.b32.xlu0 %v720, 120
        %v841 = vpop.permute.xlu0 %840
        %v843 = vsel %vm728, %v838, 0
        %v846 = vsel %vm728, %v841, 0
        %848 = vmatprep.subr.bf16.mxu0 0
        %849 = vmatpush1.bf16.xpose.msra.mxu0 %v846
        %850 = vmatprep.subr.bf16.mxu0 0
        %851 = vmatpush1.bf16.xpose.msra.mxu0 0
        %852 = vmatprep.subr.bf16.mxu0 0
        %853 = vmatpush1.bf16.xpose.msra.mxu0 0
        %854 = vmatprep.subr.bf16.mxu0 0
        %855 = vmatpush1.bf16.xpose.msra.mxu0 0
        %856 = vmatprep.subr.bf16.mxu0 0
        %857 = vmatpush1.bf16.xpose.msra.mxu0 0
        %858 = vmatprep.subr.bf16.mxu0 0
        %859 = vmatpush1.bf16.xpose.msra.mxu0 0
        %860 = vmatprep.subr.bf16.mxu0 0
        %861 = vmatpush1.bf16.xpose.msra.mxu0 0
        %862 = vmatprep.subr.bf16.mxu0 0
        %863 = vmatpush1.bf16.xpose.msra.mxu0 0
        %864 = vmatprep.subr.bf16.mxu0 0
        %865 = vmatpush1.bf16.xpose.msra.mxu0 0
        %866 = vmatprep.subr.bf16.mxu0 0
        %867 = vmatpush1.bf16.xpose.msra.mxu0 0
        %868 = vmatprep.subr.bf16.mxu0 0
        %869 = vmatpush1.bf16.xpose.msra.mxu0 0
        %870 = vmatprep.subr.bf16.mxu0 0
        %871 = vmatpush1.bf16.xpose.msra.mxu0 0
        %872 = vmatprep.subr.bf16.mxu0 0
        %873 = vmatpush1.bf16.xpose.msra.mxu0 0
        %874 = vmatprep.subr.bf16.mxu0 0
        %875 = vmatpush1.bf16.xpose.msra.mxu0 0
        %876 = vmatprep.subr.bf16.mxu0 0
        %877 = vmatpush1.bf16.xpose.msra.mxu0 0
        %878 = vmatprep.subr.bf16.mxu0 0
        %879 = vmatpush1.bf16.xpose.msra.mxu0 0
        %880 = vmatprep.mubr.bf16.mxu0 0
        %881 = vmatmul.mubr.bf16.gmra.mrb[0].mxu0 %v843
        %v882 = vpop.f32.mrb[0].mxu0
        %v883 = vadd.f32 %v727, %v882
        %v884 = vpop.f32.mrb[0].mxu0
        %v885 = vpop.f32.mrb[0].mxu0
        %v886 = vpop.f32.mrb[0].mxu0
        %887 = vdwg.mxu0
        %v888 = vsel %vm728, %v883, -inf
        %889 = vmax.xlane.f32.xlu0 %v888
        %v890 = vpop.xlane.xlu0 %889
        %v891 = vsub.f32 %v883, %v890
        %v892 = vmul.f32 %v891, 1.442695
        %v893 = vpow.pop %v892
        %v894 = vsel %vm728, %v893, 0.0
        %895 = vadd.xlane.f32.xlu0 %v894
        %v896 = vpop.xlane.xlu0 %895
        %v897 = vrcp.pop %v896
        %v898 = vmul.f32 %v893, %v897
        %v899 = vpack.c.bf16 %v898, %v898
        %901 = vrot.lane.b32.xlu0 %v721, 120
        %v902 = vpop.permute.xlu0 %901
        %v904 = vsel %vm728, %v899, 0
        %v907 = vsel %vm790, %v902, 0
        %909 = vmatprep.subr.bf16.mxu0 0
        %910 = vmatpush1.bf16.msra.mxu0 %v907
        %911 = vmatprep.subr.bf16.mxu0 0
        %912 = vmatpush1.bf16.msra.mxu0 0
        %913 = vmatprep.subr.bf16.mxu0 0
        %914 = vmatpush1.bf16.msra.mxu0 0
        %915 = vmatprep.subr.bf16.mxu0 0
        %916 = vmatpush1.bf16.msra.mxu0 0
        %917 = vmatprep.subr.bf16.mxu0 0
        %918 = vmatpush1.bf16.msra.mxu0 0
        %919 = vmatprep.subr.bf16.mxu0 0
        %920 = vmatpush1.bf16.msra.mxu0 0
        %921 = vmatprep.subr.bf16.mxu0 0
        %922 = vmatpush1.bf16.msra.mxu0 0
        %923 = vmatprep.subr.bf16.mxu0 0
        %924 = vmatpush1.bf16.msra.mxu0 0
        %925 = vmatprep.subr.bf16.mxu0 0
        %926 = vmatpush1.bf16.msra.mxu0 0
        %927 = vmatprep.subr.bf16.mxu0 0
        %928 = vmatpush1.bf16.msra.mxu0 0
        %929 = vmatprep.subr.bf16.mxu0 0
        %930 = vmatpush1.bf16.msra.mxu0 0
        %931 = vmatprep.subr.bf16.mxu0 0
        %932 = vmatpush1.bf16.msra.mxu0 0
        %933 = vmatprep.subr.bf16.mxu0 0
        %934 = vmatpush1.bf16.msra.mxu0 0
        %935 = vmatprep.subr.bf16.mxu0 0
        %936 = vmatpush1.bf16.msra.mxu0 0
        %937 = vmatprep.subr.bf16.mxu0 0
        %938 = vmatpush1.bf16.msra.mxu0 0
        %939 = vmatprep.subr.bf16.mxu0 0
        %940 = vmatpush1.bf16.msra.mxu0 0
        %941 = vmatprep.mubr.bf16.mxu0 0
        %942 = vmatmul.mubr.bf16.gmra.mrb[0].mxu0 %v904
        %v943 = vpop.f32.mrb[0].mxu0
        %v944 = vadd.f32 0.0, %v943
        %v945 = vpop.f32.mrb[0].mxu0
        %v946 = vpop.f32.mrb[0].mxu0
        %v947 = vpop.f32.mrb[0].mxu0
        %948 = vdwg.mxu0
        %v949 = vpack.c.bf16 %v944, %v944
        %s950 = scalar_lea.vmem %s9, 4
        %v951 = vld [vmem:[%s950] sm:$0xf]
        %v953 = vsel %vm728, %v949, 0
        %v956 = vsel %vm790, %v951, 0
        %958 = vmatprep.subr.bf16.mxu0 0
        %959 = vmatpush1.bf16.msra.mxu0 %v956
        %960 = vmatprep.subr.bf16.mxu0 0
        %961 = vmatpush1.bf16.msra.mxu0 0
        %962 = vmatprep.subr.bf16.mxu0 0
        %963 = vmatpush1.bf16.msra.mxu0 0
        %964 = vmatprep.subr.bf16.mxu0 0
        %965 = vmatpush1.bf16.msra.mxu0 0
        %966 = vmatprep.subr.bf16.mxu0 0
        %967 = vmatpush1.bf16.msra.mxu0 0
        %968 = vmatprep.subr.bf16.mxu0 0
        %969 = vmatpush1.bf16.msra.mxu0 0
        %970 = vmatprep.subr.bf16.mxu0 0
        %971 = vmatpush1.bf16.msra.mxu0 0
        %972 = vmatprep.subr.bf16.mxu0 0
        %973 = vmatpush1.bf16.msra.mxu0 0
        %974 = vmatprep.subr.bf16.mxu0 0
        %975 = vmatpush1.bf16.msra.mxu0 0
        %976 = vmatprep.subr.bf16.mxu0 0
        %977 = vmatpush1.bf16.msra.mxu0 0
        %978 = vmatprep.subr.bf16.mxu0 0
        %979 = vmatpush1.bf16.msra.mxu0 0
        %980 = vmatprep.subr.bf16.mxu0 0
        %981 = vmatpush1.bf16.msra.mxu0 0
        %982 = vmatprep.subr.bf16.mxu0 0
        %983 = vmatpush1.bf16.msra.mxu0 0
        %984 = vmatprep.subr.bf16.mxu0 0
        %985 = vmatpush1.bf16.msra.mxu0 0
        %986 = vmatprep.subr.bf16.mxu0 0
        %987 = vmatpush1.bf16.msra.mxu0 0
        %988 = vmatprep.subr.bf16.mxu0 0
        %989 = vmatpush1.bf16.msra.mxu0 0
        %990 = vmatprep.mubr.bf16.mxu0 0
        %991 = vmatmul.mubr.bf16.gmra.mrb[0].mxu0 %v953
        %v992 = vpop.f32.mrb[0].mxu0
        %v993 = vadd.f32 0.0, %v992
        %v994 = vpop.f32.mrb[0].mxu0
        %v995 = vpop.f32.mrb[0].mxu0
        %v996 = vpop.f32.mrb[0].mxu0
        %997 = vdwg.mxu0
        %v999 = vsel %vm728, %v834, 0
        %v1002 = vsel %vm790, %v835, 0
        %1004 = vmatprep.subr.bf16.mxu0 0
        %1005 = vmatpush1.bf16.msra.mxu0 %v1002
        %1006 = vmatprep.subr.bf16.mxu0 0
        %1007 = vmatpush1.bf16.msra.mxu0 0
        %1008 = vmatprep.subr.bf16.mxu0 0
        %1009 = vmatpush1.bf16.msra.mxu0 0
        %1010 = vmatprep.subr.bf16.mxu0 0
        %1011 = vmatpush1.bf16.msra.mxu0 0
        %1012 = vmatprep.subr.bf16.mxu0 0
        %1013 = vmatpush1.bf16.msra.mxu0 0
        %1014 = vmatprep.subr.bf16.mxu0 0
        %1015 = vmatpush1.bf16.msra.mxu0 0
        %1016 = vmatprep.subr.bf16.mxu0 0
        %1017 = vmatpush1.bf16.msra.mxu0 0
        %1018 = vmatprep.subr.bf16.mxu0 0
        %1019 = vmatpush1.bf16.msra.mxu0 0
        %1020 = vmatprep.subr.bf16.mxu0 0
        %1021 = vmatpush1.bf16.msra.mxu0 0
        %1022 = vmatprep.subr.bf16.mxu0 0
        %1023 = vmatpush1.bf16.msra.mxu0 0
        %1024 = vmatprep.subr.bf16.mxu0 0
        %1025 = vmatpush1.bf16.msra.mxu0 0
        %1026 = vmatprep.subr.bf16.mxu0 0
        %1027 = vmatpush1.bf16.msra.mxu0 0
        %1028 = vmatprep.subr.bf16.mxu0 0
        %1029 = vmatpush1.bf16.msra.mxu0 0
        %1030 = vmatprep.subr.bf16.mxu0 0
        %1031 = vmatpush1.bf16.msra.mxu0 0
        %1032 = vmatprep.subr.bf16.mxu0 0
        %1033 = vmatpush1.bf16.msra.mxu0 0
        %1034 = vmatprep.subr.bf16.mxu0 0
        %1035 = vmatpush1.bf16.msra.mxu0 0
        %1036 = vmatprep.mubr.bf16.mxu0 0
        %1037 = vmatmul.mubr.bf16.gmra.mrb[0].mxu0 %v999
        %v1038 = vpop.f32.mrb[0].mxu0
        %v1039 = vadd.f32 %v993, %v1038
        %v1040 = vpop.f32.mrb[0].mxu0
        %v1041 = vpop.f32.mrb[0].mxu0
        %v1042 = vpop.f32.mrb[0].mxu0
        %1043 = vdwg.mxu0
        %1044 = vrot.lane.b32.xlu0 %v719, 112
        %v1045 = vpop.permute.xlu0 %1044
        %1046 = vrot.lane.b32.xlu0 %v720, 112
        %v1047 = vpop.permute.xlu0 %1046
        %v1049 = vsel %vm728, %v1045, 0
        %v1052 = vsel %vm728, %v1047, 0
        %1054 = vmatprep.subr.bf16.mxu0 0
        %1055 = vmatpush1.bf16.xpose.msra.mxu0 %v1052
        %1056 = vmatprep.subr.bf16.mxu0 0
        %1057 = vmatpush1.bf16.xpose.msra.mxu0 0
        %1058 = vmatprep.subr.bf16.mxu0 0
        %1059 = vmatpush1.bf16.xpose.msra.mxu0 0
        %1060 = vmatprep.subr.bf16.mxu0 0
        %1061 = vmatpush1.bf16.xpose.msra.mxu0 0
        %1062 = vmatprep.subr.bf16.mxu0 0
        %1063 = vmatpush1.bf16.xpose.msra.mxu0 0
        %1064 = vmatprep.subr.bf16.mxu0 0
        %1065 = vmatpush1.bf16.xpose.msra.mxu0 0
        %1066 = vmatprep.subr.bf16.mxu0 0
        %1067 = vmatpush1.bf16.xpose.msra.mxu0 0
        %1068 = vmatprep.subr.bf16.mxu0 0
        %1069 = vmatpush1.bf16.xpose.msra.mxu0 0
        %1070 = vmatprep.subr.bf16.mxu0 0
        %1071 = vmatpush1.bf16.xpose.msra.mxu0 0
        %1072 = vmatprep.subr.bf16.mxu0 0
        %1073 = vmatpush1.bf16.xpose.msra.mxu0 0
        %1074 = vmatprep.subr.bf16.mxu0 0
        %1075 = vmatpush1.bf16.xpose.msra.mxu0 0
        %1076 = vmatprep.subr.bf16.mxu0 0
        %1077 = vmatpush1.bf16.xpose.msra.mxu0 0
        %1078 = vmatprep.subr.bf16.mxu0 0
        %1079 = vmatpush1.bf16.xpose.msra.mxu0 0
        %1080 = vmatprep.subr.bf16.mxu0 0
        %1081 = vmatpush1.bf16.xpose.msra.mxu0 0
        %1082 = vmatprep.subr.bf16.mxu0 0
        %1083 = vmatpush1.bf16.xpose.msra.mxu0 0
        %1084 = vmatprep.subr.bf16.mxu0 0
        %1085 = vmatpush1.bf16.xpose.msra.mxu0 0
        %1086 = vmatprep.mubr.bf16.mxu0 0
        %1087 = vmatmul.mubr.bf16.gmra.mrb[0].mxu0 %v1049
        %v1088 = vpop.f32.mrb[0].mxu0
        %v1089 = vadd.f32 %v727, %v1088
        %v1090 = vpop.f32.mrb[0].mxu0
        %v1091 = vpop.f32.mrb[0].mxu0
        %v1092 = vpop.f32.mrb[0].mxu0
        %1093 = vdwg.mxu0
        %v1094 = vsel %vm728, %v1089, -inf
        %1095 = vmax.xlane.f32.xlu0 %v1094
        %v1096 = vpop.xlane.xlu0 %1095
        %v1097 = vsub.f32 %v1089, %v1096
        %v1098 = vmul.f32 %v1097, 1.442695
        %v1099 = vpow.pop %v1098
        %v1100 = vsel %vm728, %v1099, 0.0
        %1101 = vadd.xlane.f32.xlu0 %v1100
        %v1102 = vpop.xlane.xlu0 %1101
        %v1103 = vrcp.pop %v1102
        %v1104 = vmul.f32 %v1099, %v1103
        %v1105 = vpack.c.bf16 %v1104, %v1104
        %1106 = vrot.lane.b32.xlu0 %v721, 112
        %v1107 = vpop.permute.xlu0 %1106
        %v1109 = vsel %vm728, %v1105, 0
        %v1112 = vsel %vm790, %v1107, 0
        %1114 = vmatprep.subr.bf16.mxu0 0
        %1115 = vmatpush1.bf16.msra.mxu0 %v1112
        %1116 = vmatprep.subr.bf16.mxu0 0
        %1117 = vmatpush1.bf16.msra.mxu0 0
        %1118 = vmatprep.subr.bf16.mxu0 0
        %1119 = vmatpush1.bf16.msra.mxu0 0
        %1120 = vmatprep.subr.bf16.mxu0 0
        %1121 = vmatpush1.bf16.msra.mxu0 0
        %1122 = vmatprep.subr.bf16.mxu0 0
        %1123 = vmatpush1.bf16.msra.mxu0 0
        %1124 = vmatprep.subr.bf16.mxu0 0
        %1125 = vmatpush1.bf16.msra.mxu0 0
        %1126 = vmatprep.subr.bf16.mxu0 0
        %1127 = vmatpush1.bf16.msra.mxu0 0
        %1128 = vmatprep.subr.bf16.mxu0 0
        %1129 = vmatpush1.bf16.msra.mxu0 0
        %1130 = vmatprep.subr.bf16.mxu0 0
        %1131 = vmatpush1.bf16.msra.mxu0 0
        %1132 = vmatprep.subr.bf16.mxu0 0
        %1133 = vmatpush1.bf16.msra.mxu0 0
        %1134 = vmatprep.subr.bf16.mxu0 0
        %1135 = vmatpush1.bf16.msra.mxu0 0
        %1136 = vmatprep.subr.bf16.mxu0 0
        %1137 = vmatpush1.bf16.msra.mxu0 0
        %1138 = vmatprep.subr.bf16.mxu0 0
        %1139 = vmatpush1.bf16.msra.mxu0 0
        %1140 = vmatprep.subr.bf16.mxu0 0
        %1141 = vmatpush1.bf16.msra.mxu0 0
        %1142 = vmatprep.subr.bf16.mxu0 0
        %1143 = vmatpush1.bf16.msra.mxu0 0
        %1144 = vmatprep.subr.bf16.mxu0 0
        %1145 = vmatpush1.bf16.msra.mxu0 0
        %1146 = vmatprep.mubr.bf16.mxu0 0
        %1147 = vmatmul.mubr.bf16.gmra.mrb[0].mxu0 %v1109
        %v1148 = vpop.f32.mrb[0].mxu0
        %v1149 = vadd.f32 0.0, %v1148
        %v1150 = vpop.f32.mrb[0].mxu0
        %v1151 = vpop.f32.mrb[0].mxu0
        %v1152 = vpop.f32.mrb[0].mxu0
        %1153 = vdwg.mxu0
        %v1154 = vpack.c.bf16 %v1149, %v1149
        %s1155 = scalar_lea.vmem %s9, 8
        %v1156 = vld [vmem:[%s1155] sm:$0xf]
        %v1158 = vsel %vm728, %v1154, 0
        %v1161 = vsel %vm790, %v1156, 0
        %1163 = vmatprep.subr.bf16.mxu0 0
        %1164 = vmatpush1.bf16.msra.mxu0 %v1161
        %1165 = vmatprep.subr.bf16.mxu0 0
        %1166 = vmatpush1.bf16.msra.mxu0 0
        %1167 = vmatprep.subr.bf16.mxu0 0
        %1168 = vmatpush1.bf16.msra.mxu0 0
        %1169 = vmatprep.subr.bf16.mxu0 0
        %1170 = vmatpush1.bf16.msra.mxu0 0
        %1171 = vmatprep.subr.bf16.mxu0 0
        %1172 = vmatpush1.bf16.msra.mxu0 0
        %1173 = vmatprep.subr.bf16.mxu0 0
        %1174 = vmatpush1.bf16.msra.mxu0 0
        %1175 = vmatprep.subr.bf16.mxu0 0
        %1176 = vmatpush1.bf16.msra.mxu0 0
        %1177 = vmatprep.subr.bf16.mxu0 0
        %1178 = vmatpush1.bf16.msra.mxu0 0
        %1179 = vmatprep.subr.bf16.mxu0 0
        %1180 = vmatpush1.bf16.msra.mxu0 0
        %1181 = vmatprep.subr.bf16.mxu0 0
        %1182 = vmatpush1.bf16.msra.mxu0 0
        %1183 = vmatprep.subr.bf16.mxu0 0
        %1184 = vmatpush1.bf16.msra.mxu0 0
        %1185 = vmatprep.subr.bf16.mxu0 0
        %1186 = vmatpush1.bf16.msra.mxu0 0
        %1187 = vmatprep.subr.bf16.mxu0 0
        %1188 = vmatpush1.bf16.msra.mxu0 0
        %1189 = vmatprep.subr.bf16.mxu0 0
        %1190 = vmatpush1.bf16.msra.mxu0 0
        %1191 = vmatprep.subr.bf16.mxu0 0
        %1192 = vmatpush1.bf16.msra.mxu0 0
        %1193 = vmatprep.subr.bf16.mxu0 0
        %1194 = vmatpush1.bf16.msra.mxu0 0
        %1195 = vmatprep.mubr.bf16.mxu0 0
        %1196 = vmatmul.mubr.bf16.gmra.mrb[0].mxu0 %v1158
        %v1197 = vpop.f32.mrb[0].mxu0
        %v1198 = vadd.f32 0.0, %v1197
        %v1199 = vpop.f32.mrb[0].mxu0
        %v1200 = vpop.f32.mrb[0].mxu0
        %v1201 = vpop.f32.mrb[0].mxu0
        %1202 = vdwg.mxu0
        %v1203 = vadd.f32 %v1039, %v1198
        %1204 = vrot.lane.b32.xlu0 %v719, 104
        %v1205 = vpop.permute.xlu0 %1204
        %1206 = vrot.lane.b32.xlu0 %v720, 104
        %v1207 = vpop.permute.xlu0 %1206
        %v1209 = vsel %vm728, %v1205, 0
        %v1212 = vsel %vm728, %v1207, 0
        %1214 = vmatprep.subr.bf16.mxu0 0
        %1215 = vmatpush1.bf16.xpose.msra.mxu0 %v1212
        %1216 = vmatprep.subr.bf16.mxu0 0
        %1217 = vmatpush1.bf16.xpose.msra.mxu0 0
        %1218 = vmatprep.subr.bf16.mxu0 0
        %1219 = vmatpush1.bf16.xpose.msra.mxu0 0
        %1220 = vmatprep.subr.bf16.mxu0 0
        %1221 = vmatpush1.bf16.xpose.msra.mxu0 0
        %1222 = vmatprep.subr.bf16.mxu0 0
        %1223 = vmatpush1.bf16.xpose.msra.mxu0 0
        %1224 = vmatprep.subr.bf16.mxu0 0
        %1225 = vmatpush1.bf16.xpose.msra.mxu0 0
        %1226 = vmatprep.subr.bf16.mxu0 0
        %1227 = vmatpush1.bf16.xpose.msra.mxu0 0
        %1228 = vmatprep.subr.bf16.mxu0 0
        %1229 = vmatpush1.bf16.xpose.msra.mxu0 0
        %1230 = vmatprep.subr.bf16.mxu0 0
        %1231 = vmatpush1.bf16.xpose.msra.mxu0 0
        %1232 = vmatprep.subr.bf16.mxu0 0
        %1233 = vmatpush1.bf16.xpose.msra.mxu0 0
        %1234 = vmatprep.subr.bf16.mxu0 0
        %1235 = vmatpush1.bf16.xpose.msra.mxu0 0
        %1236 = vmatprep.subr.bf16.mxu0 0
        %1237 = vmatpush1.bf16.xpose.msra.mxu0 0
        %1238 = vmatprep.subr.bf16.mxu0 0
        %1239 = vmatpush1.bf16.xpose.msra.mxu0 0
        %1240 = vmatprep.subr.bf16.mxu0 0
        %1241 = vmatpush1.bf16.xpose.msra.mxu0 0
        %1242 = vmatprep.subr.bf16.mxu0 0
        %1243 = vmatpush1.bf16.xpose.msra.mxu0 0
        %1244 = vmatprep.subr.bf16.mxu0 0
        %1245 = vmatpush1.bf16.xpose.msra.mxu0 0
        %1246 = vmatprep.mubr.bf16.mxu0 0
        %1247 = vmatmul.mubr.bf16.gmra.mrb[0].mxu0 %v1209
        %v1248 = vpop.f32.mrb[0].mxu0
        %v1249 = vadd.f32 %v727, %v1248
        %v1250 = vpop.f32.mrb[0].mxu0
        %v1251 = vpop.f32.mrb[0].mxu0
        %v1252 = vpop.f32.mrb[0].mxu0
        %1253 = vdwg.mxu0
        %v1254 = vsel %vm728, %v1249, -inf
        %1255 = vmax.xlane.f32.xlu0 %v1254
        %v1256 = vpop.xlane.xlu0 %1255
        %v1257 = vsub.f32 %v1249, %v1256
        %v1258 = vmul.f32 %v1257, 1.442695
        %v1259 = vpow.pop %v1258
        %v1260 = vsel %vm728, %v1259, 0.0
        %1261 = vadd.xlane.f32.xlu0 %v1260
        %v1262 = vpop.xlane.xlu0 %1261
        %v1263 = vrcp.pop %v1262
        %v1264 = vmul.f32 %v1259, %v1263
        %v1265 = vpack.c.bf16 %v1264, %v1264
        %1266 = vrot.lane.b32.xlu0 %v721, 104
        %v1267 = vpop.permute.xlu0 %1266
        %v1269 = vsel %vm728, %v1265, 0
        %v1272 = vsel %vm790, %v1267, 0
        %1274 = vmatprep.subr.bf16.mxu0 0
        %1275 = vmatpush1.bf16.msra.mxu0 %v1272
        %1276 = vmatprep.subr.bf16.mxu0 0
        %1277 = vmatpush1.bf16.msra.mxu0 0
        %1278 = vmatprep.subr.bf16.mxu0 0
        %1279 = vmatpush1.bf16.msra.mxu0 0
        %1280 = vmatprep.subr.bf16.mxu0 0
        %1281 = vmatpush1.bf16.msra.mxu0 0
        %1282 = vmatprep.subr.bf16.mxu0 0
        %1283 = vmatpush1.bf16.msra.mxu0 0
        %1284 = vmatprep.subr.bf16.mxu0 0
        %1285 = vmatpush1.bf16.msra.mxu0 0
        %1286 = vmatprep.subr.bf16.mxu0 0
        %1287 = vmatpush1.bf16.msra.mxu0 0
        %1288 = vmatprep.subr.bf16.mxu0 0
        %1289 = vmatpush1.bf16.msra.mxu0 0
        %1290 = vmatprep.subr.bf16.mxu0 0
        %1291 = vmatpush1.bf16.msra.mxu0 0
        %1292 = vmatprep.subr.bf16.mxu0 0
        %1293 = vmatpush1.bf16.msra.mxu0 0
        %1294 = vmatprep.subr.bf16.mxu0 0
        %1295 = vmatpush1.bf16.msra.mxu0 0
        %1296 = vmatprep.subr.bf16.mxu0 0
        %1297 = vmatpush1.bf16.msra.mxu0 0
        %1298 = vmatprep.subr.bf16.mxu0 0
        %1299 = vmatpush1.bf16.msra.mxu0 0
        %1300 = vmatprep.subr.bf16.mxu0 0
        %1301 = vmatpush1.bf16.msra.mxu0 0
        %1302 = vmatprep.subr.bf16.mxu0 0
        %1303 = vmatpush1.bf16.msra.mxu0 0
        %1304 = vmatprep.subr.bf16.mxu0 0
        %1305 = vmatpush1.bf16.msra.mxu0 0
        %1306 = vmatprep.mubr.bf16.mxu0 0
        %1307 = vmatmul.mubr.bf16.gmra.mrb[0].mxu0 %v1269
        %v1308 = vpop.f32.mrb[0].mxu0
        %v1309 = vadd.f32 0.0, %v1308
        %v1310 = vpop.f32.mrb[0].mxu0
        %v1311 = vpop.f32.mrb[0].mxu0
        %v1312 = vpop.f32.mrb[0].mxu0
        %1313 = vdwg.mxu0
        %v1314 = vpack.c.bf16 %v1309, %v1309
        %s1315 = scalar_lea.vmem %s9, 12
        %v1316 = vld [vmem:[%s1315] sm:$0xf]
        %v1318 = vsel %vm728, %v1314, 0
        %v1321 = vsel %vm790, %v1316, 0
        %1323 = vmatprep.subr.bf16.mxu0 0
        %1324 = vmatpush1.bf16.msra.mxu0 %v1321
        %1325 = vmatprep.subr.bf16.mxu0 0
        %1326 = vmatpush1.bf16.msra.mxu0 0
        %1327 = vmatprep.subr.bf16.mxu0 0
        %1328 = vmatpush1.bf16.msra.mxu0 0
        %1329 = vmatprep.subr.bf16.mxu0 0
        %1330 = vmatpush1.bf16.msra.mxu0 0
        %1331 = vmatprep.subr.bf16.mxu0 0
        %1332 = vmatpush1.bf16.msra.mxu0 0
        %1333 = vmatprep.subr.bf16.mxu0 0
        %1334 = vmatpush1.bf16.msra.mxu0 0
        %1335 = vmatprep.subr.bf16.mxu0 0
        %1336 = vmatpush1.bf16.msra.mxu0 0
        %1337 = vmatprep.subr.bf16.mxu0 0
        %1338 = vmatpush1.bf16.msra.mxu0 0
        %1339 = vmatprep.subr.bf16.mxu0 0
        %1340 = vmatpush1.bf16.msra.mxu0 0
        %1341 = vmatprep.subr.bf16.mxu0 0
        %1342 = vmatpush1.bf16.msra.mxu0 0
        %1343 = vmatprep.subr.bf16.mxu0 0
        %1344 = vmatpush1.bf16.msra.mxu0 0
        %1345 = vmatprep.subr.bf16.mxu0 0
        %1346 = vmatpush1.bf16.msra.mxu0 0
        %1347 = vmatprep.subr.bf16.mxu0 0
        %1348 = vmatpush1.bf16.msra.mxu0 0
        %1349 = vmatprep.subr.bf16.mxu0 0
        %1350 = vmatpush1.bf16.msra.mxu0 0
        %1351 = vmatprep.subr.bf16.mxu0 0
        %1352 = vmatpush1.bf16.msra.mxu0 0
        %1353 = vmatprep.subr.bf16.mxu0 0
        %1354 = vmatpush1.bf16.msra.mxu0 0
        %1355 = vmatprep.mubr.bf16.mxu0 0
        %1356 = vmatmul.mubr.bf16.gmra.mrb[0].mxu0 %v1318
        %v1357 = vpop.f32.mrb[0].mxu0
        %v1358 = vadd.f32 0.0, %v1357
        %v1359 = vpop.f32.mrb[0].mxu0
        %v1360 = vpop.f32.mrb[0].mxu0
        %v1361 = vpop.f32.mrb[0].mxu0
        %1362 = vdwg.mxu0
        %v1363 = vadd.f32 %v1203, %v1358
        %v1364 = vld [vmem:[%s10] sm:$0x1]
        %v1366 = vlaneseq
        %v1367 = vshrl.u32 %v1366, 7
        %v1368 = vsub.s32 0, %v1367
        %v1369 = vrot.slane %v1364, %v1368
        %v1371 = vadd.f32 %v1363, %v1369
        %v1372 = vpack.c.bf16 %v1371, %v1371
        %v1374 = vshrl.u32 %v1372, 16
        %1376 = vrot.lane.b32.xlu0 %v1374, 32
        %v1377 = vpop.permute.xlu0 %1376
        %v1379 = vrot.slane %v1372, 1
        %1380 = vrot.lane.b32.xlu0 %v1379, 64
        %v1381 = vpop.permute.xlu0 %1380
        %v1382 = vrot.slane %v1374, 1
        %1383 = vrot.lane.b32.xlu0 %v1382, 96
        %v1384 = vpop.permute.xlu0 %1383
        %v1385 = vrot.slane %v1372, 2
        %v1386 = vrot.slane %v1374, 2
        %1387 = vrot.lane.b32.xlu0 %v1386, 32
        %v1388 = vpop.permute.xlu0 %1387
        %v1389 = vrot.slane %v1372, 3
        %1390 = vrot.lane.b32.xlu0 %v1389, 64
        %v1391 = vpop.permute.xlu0 %1390
        %v1392 = vrot.slane %v1374, 3
        %1393 = vrot.lane.b32.xlu0 %v1392, 96
        %v1394 = vpop.permute.xlu0 %1393
        %v1396 = vsel %vm542, %v1372, %v1377
        %vm1397 = vcmask 523264
        %v1399 = vsel %vm1397, %v1396, %v1381
        %vm1400 = vcmask 785408
        %v1402 = vsel %vm1400, %v1399, %v1384
        %v1405 = vsel %vm542, %v1385, %v1388
        %v1407 = vsel %vm1397, %v1405, %v1391
        %v1409 = vsel %vm1400, %v1407, %v1394
        %v1412 = vcombine.low %v1402, %v1409
        %v1414 = vunpack.c.l.s4 1966171168
        %v1415 = vunpack.c.0.s8 %v1414
        %v1416 = vlaneseq
        %v1417 = vshrl.u32 %v1416, 7
        %v1418 = vsub.s32 %v1415, %v1417
        %v1419 = vrot.slane %v1412, %v1418
        %v1421 = vunpack.c.l.s4 1966171168
        %v1422 = vunpack.c.0.s8 %v1421
        %v1423 = vlaneseq
        %v1424 = vshrl.u32 %v1423, 7
        %v1425 = vsub.s32 %v1422, %v1424
        %v1426 = vrot.slane %v1419, %v1425
        %vm1428 = vcmask 1040384
        %vm1429 = vsmask.f32 256
        %vm1430 = vmand %vm1428, %vm1429
        %vm1431 = vcmask 1041409
        %vm1432 = vsmask.f32 1280
        %vm1433 = vmand %vm1431, %vm1432
        %vm1434 = vmor %vm1433, %vm1430
        %v1435 = vld [vmem:[%s514] sm:$0x3]
        %v1436 = vsel %vm1434, %v1426, %v1435
        %1437 = vst [vmem:[%s514] sm:$0x3] %v1436
        %p1438 = scmp.lt.s32.totalorder %s30, 1
        %s1439 = scalar_select %p1438, %s30, 1
        %s1440 = smul.addr %s1439, 2
        %s1441 = scalar_lea.vmem %s11, %s1440
        // Predicated region
        $region89: #{tpu_custom_call.1} parent=63 // pred_check
          %p1442 = pneg %p294
        $region90: #{tpu_custom_call.1} parent=63 // pred_check_branch
          %1444 = sbr.rel (%p1442) target = $region92
        $region91: #{tpu_custom_call.1} parent=63 // pred_region
          _
        $region92: #{tpu_custom_call.1} parent=63 // pred_fallthru
          _
      $region64: #{tpu_custom_call.1} parent=5 // pred_fallthru
        _
      %p1445 = scmp.le.s32.totalorder 2, %s25
      // Predicated region
      $region93: #{tpu_custom_call.1} parent=5 // pred_check
        %p1446 = pneg %p1445
      $region94: #{tpu_custom_call.1} parent=5 // pred_check_branch
        %1448 = sbr.rel (%p1446) target = $region96
      $region95: #{tpu_custom_call.1} parent=5 // pred_region
        %s1449 = ssub.s32 %s25, 2
        // Predicated region
        $region97: #{tpu_custom_call.1} parent=95 // pred_check
          %p1450 = pneg %p300
        $region98: #{tpu_custom_call.1} parent=95 // pred_check_branch
          %1452 = sbr.rel (%p1450) target = $region100
        $region99: #{tpu_custom_call.1} parent=95 // pred_region
          %p1453 = scmp.lt.s32.totalorder %s31, 1
          %s1454 = scalar_select %p1453, %s31, 1
          %s1455 = smul.addr %s1454, 2
          %s1456 = scalar_lea.vmem %s11, %s1455
        $region100: #{tpu_custom_call.1} parent=95 // pred_fallthru
          _
      $region96: #{tpu_custom_call.1} parent=5 // pred_fallthru
        _
    $region6: #{tpu_custom_call.1} parent=1 // loop_footer
      %s29 = sadd.s32 1, %s25
    $region7: #{tpu_custom_call.1} parent=1 // loop_footer_branch
      %24 = sbr.rel target = $region3
    $region8: #{tpu_custom_call.1} parent=1 // loop_exit
      _
    %1457 = vsyncpa [#allocation3], 1
    %s1458 = scalar_lea.sflag [#allocation3], 1
    %1459 = vsyncpa %s1458, 1
    %1460 = vsyncpa [#allocation5], 1
    %s1461 = scalar_lea.sflag [#allocation5], 1
    %1462 = vsyncpa %s1461, 1
    %1463 = vsyncpa [#allocation8], 1
    %1464 = vsyncpa [#allocation11], 1

</llo_original>
